<compile_context>
chip_gen: v6e
topology: v6e:2x2x1
jax: 0.10.0
libtpu: 0.0.40
codegen_flags: <defaults>
</compile_context>

<pallas_src>
import numpy as np
import jax
import jax.numpy as jnp
from jax.experimental import pallas as pl
from jax.experimental.pallas import tpu as pltpu


def _rup(n, m):
    return ((n + m - 1) // m) * m


# ----------------------------------------------------------------------------
# fused kernel factory: all TCN blocks + outer residuals + GRU + Linear head
# ----------------------------------------------------------------------------
def _make_fused_kernel(meta):
    B = meta["B"]; L = meta["L"]; K = meta["K"]; H = meta["H"]
    O_pad = meta["O_pad"]; T = meta["T"]
    R_H0, R_WIH = meta["R_H0"], meta["R_WIH"]
    R_WHH, R_WLIN = meta["R_WHH"], meta["R_WLIN"]
    structure = meta["structure"]          # static: offsets / channel counts
    H3 = 3 * H

    def shift_rep(v, s):
        """(B, L) -> y with y[:, t] = v[:, max(t - s, 0)] (causal, replicate pad)."""
        if s <= 0:
            return v
        if s >= L:
            return jnp.broadcast_to(v[:, 0:1], (B, L))
        left = jnp.broadcast_to(v[:, 0:1], (B, s))
        return jnp.concatenate([left, v[:, :L - s]], axis=1)

    def kernel(x_ref, tw_ref, slab_ref, o_ref, hscr_ref):
        # ---- dilated causal conv + ReLU as VPU FMAs (whole batch at once) ----
        def conv_relu(zs, base_w, base_b, cin, cout, dil):
            taps = [[shift_rep(zs[c], dil * (K - 1 - j)) for j in range(K)]
                    for c in range(cin)]
            outs = []
            for o in range(cout):
                acc = None
                for j in range(K):
                    for c in range(cin):
                        w = tw_ref[base_w + o * (K * cin) + j * cin + c]
                        term = w * taps[c][j]
                        acc = term if acc is None else acc + term
                acc = acc + tw_ref[base_b + o]
                outs.append(jnp.maximum(acc, 0.0))
            return outs

        # ---------------- TCN stacks (outer residual fused in) ----------------
        # y is a list of per-channel (B, L) arrays.
        y = [x_ref[c] for c in range(structure[0][0]["cin"])]
        for levels in structure:
            skips = list(y)                        # input of this TemporalConvNet
            n_lvl = len(levels)
            for i, lvl in enumerate(levels):
                dil = 2 ** i
                cin, cout = lvl["cin"], lvl["cout"]
                h1 = conv_relu(y, lvl["w1"], lvl["b1"], cin, cout, dil)
                h2 = conv_relu(h1, lvl["w2"], lvl["b2"], cout, cout, dil)
                if "wd" in lvl:                    # 1x1 downsample conv (no ReLU)
                    res = []
                    for o in range(cout):
                        acc = None
                        for c in range(cin):
                            term = tw_ref[lvl["wd"] + o * cin + c] * y[c]
                            acc = term if acc is None else acc + term
                        res.append(acc + tw_ref[lvl["bd"] + o])
                else:
                    res = y
                out = [jnp.maximum(h2[o] + res[o], 0.0) for o in range(cout)]
                if i == n_lvl - 1:                 # y = TemporalConvNet(y) + y
                    out = [out[o] + skips[o] for o in range(cout)]
                y = out

        # ---------------- GRU (batch_first, h0 parameter) + Linear ----------------
        gbias = slab_ref[0:1, 0:H3]                # b_ih with b_hh[r|z] folded in
        bhh_n = slab_ref[1:2, 0:H]                 # b_hn stays inside the r gate
        blin = slab_ref[2:3, 0:O_pad]
        h = slab_ref[R_H0:R_H0 + B, 0:H]           # (B, H)
        wih = slab_ref[R_WIH:R_WIH + L, 0:H3]      # (L, 3H)
        whh = slab_ref[R_WHH:R_WHH + H, 0:H3]      # (H, 3H)
        wlin = slab_ref[R_WLIN:R_WLIN + H, 0:O_pad]

        hscr_ref[...] = jnp.zeros_like(hscr_ref)
        # TODO(synk): switch to lax.fori_loop once T grows past ~4; the PyTorch head
        # reshape forces T == num_channels[-1] == 1, so the unrolled loop is exact.
        for t in range(T):
            gi = jnp.dot(y[t], wih, preferred_element_type=jnp.float32) + gbias
            gh = jnp.dot(h, whh, preferred_element_type=jnp.float32)
            r = jax.nn.sigmoid(gi[:, 0:H] + gh[:, 0:H])          # torch order [r|z|n]
            z = jax.nn.sigmoid(gi[:, H:2 * H] + gh[:, H:2 * H])
            n = jnp.tanh(gi[:, 2 * H:H3] + r * (gh[:, 2 * H:H3] + bhh_n))
            h = (1.0 - z) * n + z * h
            hscr_ref[t * B:(t + 1) * B, :] = h

        # single lane+sublane-dense store (rows_pad x O_pad)
        o_ref[...] = (jnp.dot(hscr_ref[...], wlin, preferred_element_type=jnp.float32)
                      + blin)

    return kernel


# ----------------------------------------------------------------------------
# host-side parameter packing (done once)
# ----------------------------------------------------------------------------
def pack_params(params, *, batch, seq_len):
    B, L = batch, seq_len
    K = params["kernel_size"]
    H = params["h0"].shape[1]
    O = params["wlin"].shape[1]
    O_pad = _rup(O, 128)

    assert params["wih"].shape[0] == L, "GRU input size must equal seq_len"
    assert params["h0"].shape[0] == B

    # ---- TCN conv weights/biases -> one flat f32 SMEM vector + static offsets ----
    flat, structure = [], []
    off = 0

    def push(arr):
        nonlocal off
        a = jnp.asarray(arr, jnp.float32).reshape(-1)
        base = off
        flat.append(a)
        off += a.shape[0]
        return base

    for blk in params["tcn"]:
        levels = []
        for lvl in blk:
            cout = lvl["b1"].shape[0]
            cin = lvl["w1f"].shape[1] // K
            d = {"cin": cin, "cout": cout,
                 "w1": push(lvl["w1f"]), "b1": push(lvl["b1"]),
                 "w2": push(lvl["w2f"]), "b2": push(lvl["b2"])}
            if "wd" in lvl:
                d["wd"] = push(lvl["wd"])
                d["bd"] = push(lvl["bd"])
            levels.append(d)
        structure.append(levels)
    tcn_w = jnp.concatenate(flat, axis=0)

    Cin = structure[0][0]["cin"]
    prev = Cin
    for blk in structure:
        assert blk[0]["cin"] == prev, "channel chain mismatch between blocks"
        for i in range(1, len(blk)):
            assert blk[i]["cin"] == blk[i - 1]["cout"], "channel chain mismatch"
        assert blk[-1]["cout"] == blk[0]["cin"], \
            "outer residual y = TCN(y) + y requires num_channels[-1] == input channels"
        prev = blk[-1]["cout"]
    T = prev
    assert T == 1, "PyTorch head reshape(batch,1,out) requires num_channels[-1] == 1"

    # ---- GRU / head weights -> one 8-row-aligned f32 VMEM slab ----
    gbias = params["bih"].at[:, :2 * H].add(params["bhh"][:, :2 * H])   # (1, 3H)
    bhh_n = params["bhh"][:, 2 * H:]                                    # (1, H)

    W_slab = max(3 * H, O_pad)
    Bp, Lp, Hp = _rup(B, 8), _rup(L, 8), _rup(H, 8)
    R_H0 = 8
    R_WIH = R_H0 + Bp
    R_WHH = R_WIH + Lp
    R_WLIN = R_WHH + Hp
    R_TOT = R_WLIN + Hp

    slab = jnp.zeros((R_TOT, W_slab), jnp.float32)
    slab = slab.at[0, :3 * H].set(gbias[0])
    slab = slab.at[1, :H].set(bhh_n[0])
    slab = slab.at[2, :O].set(params["blin"][0])
    slab = slab.at[R_H0:R_H0 + B, :H].set(params["h0"])
    slab = slab.at[R_WIH:R_WIH + L, :3 * H].set(params["wih"])
    slab = slab.at[R_WHH:R_WHH + H, :3 * H].set(params["whh"])
    slab = slab.at[R_WLIN:R_WLIN + H, :O].set(params["wlin"])

    rows_pad = max(8, _rup(B * T, 8))

    meta = dict(B=B, L=L, K=K, H=H, O=O, O_pad=O_pad, T=T, Cin=Cin,
                rows_pad=rows_pad, R_H0=R_H0, R_WIH=R_WIH, R_WHH=R_WHH,
                R_WLIN=R_WLIN, structure=structure)
    return {"tcn_w": tcn_w, "slab": slab, "meta": meta}


# ----------------------------------------------------------------------------
# wrapper
# ----------------------------------------------------------------------------
def tcn_forward(packed, x):
    """x: (batch, input_channel, seq_len) == NCL, matching the PyTorch forward."""
    meta = packed["meta"]
    B, Cin, L = x.shape
    assert (B, Cin, L) == (meta["B"], meta["Cin"], meta["L"])

    x_t = jnp.transpose(x, (1, 0, 2))          # (Cin, B, L): per-channel (B, L) rows
    kernel = _make_fused_kernel(meta)

    out_pad = pl.pallas_call(
        kernel,
        out_shape=jax.ShapeDtypeStruct((meta["rows_pad"], meta["O_pad"]), jnp.float32),
        in_specs=[pl.BlockSpec(memory_space=pltpu.MemorySpace.VMEM),   # x
                  pl.BlockSpec(memory_space=pltpu.MemorySpace.SMEM),   # packed conv w
                  pl.BlockSpec(memory_space=pltpu.MemorySpace.VMEM)],  # GRU/head slab
        out_specs=pl.BlockSpec(memory_space=pltpu.MemorySpace.VMEM),
        scratch_shapes=[pltpu.VMEM((meta["rows_pad"], meta["H"]), jnp.float32)],
    )(x_t, packed["tcn_w"], packed["slab"])

    O, T = meta["O"], meta["T"]
    # torch: y.reshape(-1, 128) -> linear -> reshape(batch_size, 1, output_n)
    # (T == 1 is asserted in pack_params, so rows are already in batch order)
    return out_pad[:B * T, :O].reshape(B, 1, O)


# ----------------------------------------------------------------------------
# parameters
# ----------------------------------------------------------------------------
def init_params(key, *, batch, input_size, num_channels, kernel_size, block_num,
                input_n, hidden, output_n, scale=0.1):
    counter = [0]

    def nxt():
        counter[0] += 1
        return jax.random.fold_in(key, counter[0])

    def flatten_conv(w_torch):             # torch layout (Cout, Cin, K) -> (Cout, K*Cin)
        cout, cin, k = w_torch.shape
        return jnp.transpose(w_torch, (0, 2, 1)).reshape(cout, k * cin)

    params = {"tcn": [], "kernel_size": kernel_size}
    for _ in range(block_num):             # independent TemporalConvNets
        levels = []
        for i, out_ch in enumerate(num_channels):
            in_ch = input_size if i == 0 else num_channels[i - 1]
            w1 = jax.random.normal(nxt(), (out_ch, in_ch, kernel_size), jnp.float32) * scale
            w2 = jax.random.normal(nxt(), (out_ch, out_ch, kernel_size), jnp.float32) * scale
            lvl = {
                "w1f": flatten_conv(w1),
                "b1": jax.random.normal(nxt(), (out_ch, 1), jnp.float32) * scale,
                "w2f": flatten_conv(w2),
                "b2": jax.random.normal(nxt(), (out_ch, 1), jnp.float32) * scale,
            }
            if in_ch != out_ch:             # downsample 1x1 conv (with bias)
                lvl["wd"] = jax.random.normal(nxt(), (out_ch, in_ch), jnp.float32) * scale
                lvl["bd"] = jax.random.normal(nxt(), (out_ch, 1), jnp.float32) * scale
            levels.append(lvl)
        params["tcn"].append(levels)

    H = hidden
    params["h0"] = jnp.zeros((batch, H), jnp.float32)   # nn.Parameter(torch.zeros(1, batch, 128))
    params["wih"] = jax.random.normal(nxt(), (input_n, 3 * H), jnp.float32) * scale   # W_ih^T
    params["whh"] = jax.random.normal(nxt(), (H, 3 * H), jnp.float32) * scale         # W_hh^T
    params["bih"] = jax.random.normal(nxt(), (1, 3 * H), jnp.float32) * scale
    params["bhh"] = jax.random.normal(nxt(), (1, 3 * H), jnp.float32) * scale
    params["wlin"] = jax.random.normal(nxt(), (H, output_n), jnp.float32) * scale
    params["blin"] = jax.random.normal(nxt(), (1, output_n), jnp.float32) * scale
    return params


# ----------------------------------------------------------------------------
# pure-JAX reference (same math, no Pallas) for correctness checking
# ----------------------------------------------------------------------------
def _ref_forward(params, x):
    K = params["kernel_size"]
    B, Cin, L = x.shape
    H = params["h0"].shape[1]

    def conv(inp, wflat, bias, dil):                      # inp: (B, C, L)
        taps = []
        for j in range(K):
            s = dil * (K - 1 - j)
            idx = np.maximum(np.arange(L) - s, 0)
            taps.append(inp[:, :, idx])
        xs = jnp.concatenate(taps, axis=1)                # (B, K*C, L)
        return jnp.einsum('of,bfl->bol', wflat, xs) + bias[None]

    y = x
    for blk in params["tcn"]:
        skip = y
        z = y
        for i, lvl in enumerate(blk):
            dil = 2 ** i
            h1 = jnp.maximum(conv(z, lvl["w1f"], lvl["b1"], dil), 0.0)
            h2 = jnp.maximum(conv(h1, lvl["w2f"], lvl["b2"], dil), 0.0)
            if "wd" in lvl:
                res = jnp.einsum('oc,bcl->bol', lvl["wd"], z) + lvl["bd"][None]
            else:
                res = z
            z = jnp.maximum(h2 + res, 0.0)
        y = z + skip

    T = y.shape[1]
    h = params["h0"]
    outs = []
    for t in range(T):
        gi = y[:, t, :] @ params["wih"] + params["bih"]
        gh = h @ params["whh"] + params["bhh"]
        r = jax.nn.sigmoid(gi[:, :H] + gh[:, :H])
        zg = jax.nn.sigmoid(gi[:, H:2 * H] + gh[:, H:2 * H])
        n = jnp.tanh(gi[:, 2 * H:] + r * gh[:, 2 * H:])
        h = (1.0 - zg) * n + zg * h
        outs.append(h)
    hseq = jnp.stack(outs, axis=1).reshape(B * T, H)
    out = hseq @ params["wlin"] + params["blin"]
    O = params["wlin"].shape[1]
    return out.reshape(B, 1, O)


# TODO(synk): training-mode nn.Dropout masks are not implemented (identity at inference).

if __name__ == "__main__":
    batch_size = 2
    input_size = 1          # C_in; must be 1 so the final reshape(batch, 1, out) is valid
    input_n = 9             # seq_len L (== GRU input feature size)
    num_channels = [4, 1]   # last channel count == input_size for the outer residual
    kernel_size = 2
    block_num = 2
    hidden = 128
    output_n = 25

    key = jax.random.PRNGKey(0)
    pkey, xkey = jax.random.split(key)

    params = init_params(pkey, batch=batch_size, input_size=input_size,
                         num_channels=num_channels, kernel_size=kernel_size,
                         block_num=block_num, input_n=input_n, hidden=hidden,
                         output_n=output_n)

    x = jax.random.normal(xkey, (batch_size, input_size, input_n), jnp.float32)

    packed = pack_params(params, batch=batch_size, seq_len=input_n)

    y = tcn_forward(packed, x)
    y = jax.block_until_ready(y)

    assert y.shape == (batch_size, 1, output_n), y.shape
    assert bool(jnp.all(jnp.isfinite(y)))

    y_ref = _ref_forward(params, x)
    max_err = float(jnp.max(jnp.abs(y - y_ref)))
    assert bool(jnp.allclose(y, y_ref, rtol=1e-3, atol=1e-4)), f"max_err={max_err}"

    print("KERNEL_OK")
</pallas_src>

<mosaic_0001>
module attributes {stable_mosaic.version = 11 : i64} {
  func.func @kernel(%arg0: memref<1x2x9xf32, #tpu.memory_space<vmem>>, %arg1: memref<146xf32, #tpu.memory_space<smem>>, %arg2: memref<288x384xf32, #tpu.memory_space<vmem>>, %arg3: memref<8x128xf32, #tpu.memory_space<vmem>>, %arg4: memref<8x128xf32, #tpu.memory_space<vmem>>) attributes {dimension_semantics = [], scalar_prefetch = 0 : i64, scratch_operands = 1 : i64, tpu.core_type = #tpu.core_type<tc>} {
    %c0 = arith.constant 0 : index
    %c0_0 = arith.constant 0 : index
    %c0_1 = arith.constant 0 : index
    %0 = vector.load %arg0[%c0, %c0_0, %c0_1] : memref<1x2x9xf32, #tpu.memory_space<vmem>>, vector<1x2x9xf32>
    %1 = vector.shape_cast %0 : vector<1x2x9xf32> to vector<2x9xf32>
    %2 = vector.extract_strided_slice %1 {offsets = [0, 0], sizes = [2, 1], strides = [1, 1]} : vector<2x9xf32> to vector<2x1xf32>
    %3 = vector.extract_strided_slice %1 {offsets = [0, 0], sizes = [2, 8], strides = [1, 1]} : vector<2x9xf32> to vector<2x8xf32>
    %4 = tpu.concatenate %2, %3 in 1 : vector<2x1xf32>, vector<2x8xf32> -> vector<2x9xf32>
    %c0_2 = arith.constant 0 : index
    %5 = memref.load %arg1[%c0_2] : memref<146xf32, #tpu.memory_space<smem>>
    %6 = vector.broadcast %5 : f32 to vector<2x9xf32>
    %7 = arith.mulf %6, %4 : vector<2x9xf32>
    %c1 = arith.constant 1 : index
    %8 = memref.load %arg1[%c1] : memref<146xf32, #tpu.memory_space<smem>>
    %9 = vector.broadcast %8 : f32 to vector<2x9xf32>
    %10 = arith.mulf %9, %1 : vector<2x9xf32>
    %11 = arith.addf %7, %10 : vector<2x9xf32>
    %c8 = arith.constant 8 : index
    %12 = memref.load %arg1[%c8] : memref<146xf32, #tpu.memory_space<smem>>
    %13 = vector.broadcast %12 : f32 to vector<2x9xf32>
    %14 = arith.addf %11, %13 : vector<2x9xf32>
    %cst = arith.constant 0.000000e+00 : f32
    %15 = vector.broadcast %cst : f32 to vector<2x9xf32>
    %16 = arith.maximumf %14, %15 : vector<2x9xf32>
    %c2 = arith.constant 2 : index
    %17 = memref.load %arg1[%c2] : memref<146xf32, #tpu.memory_space<smem>>
    %18 = vector.broadcast %17 : f32 to vector<2x9xf32>
    %19 = arith.mulf %18, %4 : vector<2x9xf32>
    %c3 = arith.constant 3 : index
    %20 = memref.load %arg1[%c3] : memref<146xf32, #tpu.memory_space<smem>>
    %21 = vector.broadcast %20 : f32 to vector<2x9xf32>
    %22 = arith.mulf %21, %1 : vector<2x9xf32>
    %23 = arith.addf %19, %22 : vector<2x9xf32>
    %c9 = arith.constant 9 : index
    %24 = memref.load %arg1[%c9] : memref<146xf32, #tpu.memory_space<smem>>
    %25 = vector.broadcast %24 : f32 to vector<2x9xf32>
    %26 = arith.addf %23, %25 : vector<2x9xf32>
    %cst_3 = arith.constant 0.000000e+00 : f32
    %27 = vector.broadcast %cst_3 : f32 to vector<2x9xf32>
    %28 = arith.maximumf %26, %27 : vector<2x9xf32>
    %c4 = arith.constant 4 : index
    %29 = memref.load %arg1[%c4] : memref<146xf32, #tpu.memory_space<smem>>
    %30 = vector.broadcast %29 : f32 to vector<2x9xf32>
    %31 = arith.mulf %30, %4 : vector<2x9xf32>
    %c5 = arith.constant 5 : index
    %32 = memref.load %arg1[%c5] : memref<146xf32, #tpu.memory_space<smem>>
    %33 = vector.broadcast %32 : f32 to vector<2x9xf32>
    %34 = arith.mulf %33, %1 : vector<2x9xf32>
    %35 = arith.addf %31, %34 : vector<2x9xf32>
    %c10 = arith.constant 10 : index
    %36 = memref.load %arg1[%c10] : memref<146xf32, #tpu.memory_space<smem>>
    %37 = vector.broadcast %36 : f32 to vector<2x9xf32>
    %38 = arith.addf %35, %37 : vector<2x9xf32>
    %cst_4 = arith.constant 0.000000e+00 : f32
    %39 = vector.broadcast %cst_4 : f32 to vector<2x9xf32>
    %40 = arith.maximumf %38, %39 : vector<2x9xf32>
    %c6 = arith.constant 6 : index
    %41 = memref.load %arg1[%c6] : memref<146xf32, #tpu.memory_space<smem>>
    %42 = vector.broadcast %41 : f32 to vector<2x9xf32>
    %43 = arith.mulf %42, %4 : vector<2x9xf32>
    %c7 = arith.constant 7 : index
    %44 = memref.load %arg1[%c7] : memref<146xf32, #tpu.memory_space<smem>>
    %45 = vector.broadcast %44 : f32 to vector<2x9xf32>
    %46 = arith.mulf %45, %1 : vector<2x9xf32>
    %47 = arith.addf %43, %46 : vector<2x9xf32>
    %c11 = arith.constant 11 : index
    %48 = memref.load %arg1[%c11] : memref<146xf32, #tpu.memory_space<smem>>
    %49 = vector.broadcast %48 : f32 to vector<2x9xf32>
    %50 = arith.addf %47, %49 : vector<2x9xf32>
    %cst_5 = arith.constant 0.000000e+00 : f32
    %51 = vector.broadcast %cst_5 : f32 to vector<2x9xf32>
    %52 = arith.maximumf %50, %51 : vector<2x9xf32>
    %53 = vector.extract_strided_slice %16 {offsets = [0, 0], sizes = [2, 1], strides = [1, 1]} : vector<2x9xf32> to vector<2x1xf32>
    %54 = vector.extract_strided_slice %16 {offsets = [0, 0], sizes = [2, 8], strides = [1, 1]} : vector<2x9xf32> to vector<2x8xf32>
    %55 = tpu.concatenate %53, %54 in 1 : vector<2x1xf32>, vector<2x8xf32> -> vector<2x9xf32>
    %56 = vector.extract_strided_slice %28 {offsets = [0, 0], sizes = [2, 1], strides = [1, 1]} : vector<2x9xf32> to vector<2x1xf32>
    %57 = vector.extract_strided_slice %28 {offsets = [0, 0], sizes = [2, 8], strides = [1, 1]} : vector<2x9xf32> to vector<2x8xf32>
    %58 = tpu.concatenate %56, %57 in 1 : vector<2x1xf32>, vector<2x8xf32> -> vector<2x9xf32>
    %59 = vector.extract_strided_slice %40 {offsets = [0, 0], sizes = [2, 1], strides = [1, 1]} : vector<2x9xf32> to vector<2x1xf32>
    %60 = vector.extract_strided_slice %40 {offsets = [0, 0], sizes = [2, 8], strides = [1, 1]} : vector<2x9xf32> to vector<2x8xf32>
    %61 = tpu.concatenate %59, %60 in 1 : vector<2x1xf32>, vector<2x8xf32> -> vector<2x9xf32>
    %62 = vector.extract_strided_slice %52 {offsets = [0, 0], sizes = [2, 1], strides = [1, 1]} : vector<2x9xf32> to vector<2x1xf32>
    %63 = vector.extract_strided_slice %52 {offsets = [0, 0], sizes = [2, 8], strides = [1, 1]} : vector<2x9xf32> to vector<2x8xf32>
    %64 = tpu.concatenate %62, %63 in 1 : vector<2x1xf32>, vector<2x8xf32> -> vector<2x9xf32>
    %c12 = arith.constant 12 : index
    %65 = memref.load %arg1[%c12] : memref<146xf32, #tpu.memory_space<smem>>
    %66 = vector.broadcast %65 : f32 to vector<2x9xf32>
    %67 = arith.mulf %66, %55 : vector<2x9xf32>
    %c13 = arith.constant 13 : index
    %68 = memref.load %arg1[%c13] : memref<146xf32, #tpu.memory_space<smem>>
    %69 = vector.broadcast %68 : f32 to vector<2x9xf32>
    %70 = arith.mulf %69, %58 : vector<2x9xf32>
    %71 = arith.addf %67, %70 : vector<2x9xf32>
    %c14 = arith.constant 14 : index
    %72 = memref.load %arg1[%c14] : memref<146xf32, #tpu.memory_space<smem>>
    %73 = vector.broadcast %72 : f32 to vector<2x9xf32>
    %74 = arith.mulf %73, %61 : vector<2x9xf32>
    %75 = arith.addf %71, %74 : vector<2x9xf32>
    %c15 = arith.constant 15 : index
    %76 = memref.load %arg1[%c15] : memref<146xf32, #tpu.memory_space<smem>>
    %77 = vector.broadcast %76 : f32 to vector<2x9xf32>
    %78 = arith.mulf %77, %64 : vector<2x9xf32>
    %79 = arith.addf %75, %78 : vector<2x9xf32>
    %c16 = arith.constant 16 : index
    %80 = memref.load %arg1[%c16] : memref<146xf32, #tpu.memory_space<smem>>
    %81 = vector.broadcast %80 : f32 to vector<2x9xf32>
    %82 = arith.mulf %81, %16 : vector<2x9xf32>
    %83 = arith.addf %79, %82 : vector<2x9xf32>
    %c17 = arith.constant 17 : index
    %84 = memref.load %arg1[%c17] : memref<146xf32, #tpu.memory_space<smem>>
    %85 = vector.broadcast %84 : f32 to vector<2x9xf32>
    %86 = arith.mulf %85, %28 : vector<2x9xf32>
    %87 = arith.addf %83, %86 : vector<2x9xf32>
    %c18 = arith.constant 18 : index
    %88 = memref.load %arg1[%c18] : memref<146xf32, #tpu.memory_space<smem>>
    %89 = vector.broadcast %88 : f32 to vector<2x9xf32>
    %90 = arith.mulf %89, %40 : vector<2x9xf32>
    %91 = arith.addf %87, %90 : vector<2x9xf32>
    %c19 = arith.constant 19 : index
    %92 = memref.load %arg1[%c19] : memref<146xf32, #tpu.memory_space<smem>>
    %93 = vector.broadcast %92 : f32 to vector<2x9xf32>
    %94 = arith.mulf %93, %52 : vector<2x9xf32>
    %95 = arith.addf %91, %94 : vector<2x9xf32>
    %c44 = arith.constant 44 : index
    %96 = memref.load %arg1[%c44] : memref<146xf32, #tpu.memory_space<smem>>
    %97 = vector.broadcast %96 : f32 to vector<2x9xf32>
    %98 = arith.addf %95, %97 : vector<2x9xf32>
    %cst_6 = arith.constant 0.000000e+00 : f32
    %99 = vector.broadcast %cst_6 : f32 to vector<2x9xf32>
    %100 = arith.maximumf %98, %99 : vector<2x9xf32>
    %c20 = arith.constant 20 : index
    %101 = memref.load %arg1[%c20] : memref<146xf32, #tpu.memory_space<smem>>
    %102 = vector.broadcast %101 : f32 to vector<2x9xf32>
    %103 = arith.mulf %102, %55 : vector<2x9xf32>
    %c21 = arith.constant 21 : index
    %104 = memref.load %arg1[%c21] : memref<146xf32, #tpu.memory_space<smem>>
    %105 = vector.broadcast %104 : f32 to vector<2x9xf32>
    %106 = arith.mulf %105, %58 : vector<2x9xf32>
    %107 = arith.addf %103, %106 : vector<2x9xf32>
    %c22 = arith.constant 22 : index
    %108 = memref.load %arg1[%c22] : memref<146xf32, #tpu.memory_space<smem>>
    %109 = vector.broadcast %108 : f32 to vector<2x9xf32>
    %110 = arith.mulf %109, %61 : vector<2x9xf32>
    %111 = arith.addf %107, %110 : vector<2x9xf32>
    %c23 = arith.constant 23 : index
    %112 = memref.load %arg1[%c23] : memref<146xf32, #tpu.memory_space<smem>>
    %113 = vector.broadcast %112 : f32 to vector<2x9xf32>
    %114 = arith.mulf %113, %64 : vector<2x9xf32>
    %115 = arith.addf %111, %114 : vector<2x9xf32>
    %c24 = arith.constant 24 : index
    %116 = memref.load %arg1[%c24] : memref<146xf32, #tpu.memory_space<smem>>
    %117 = vector.broadcast %116 : f32 to vector<2x9xf32>
    %118 = arith.mulf %117, %16 : vector<2x9xf32>
    %119 = arith.addf %115, %118 : vector<2x9xf32>
    %c25 = arith.constant 25 : index
    %120 = memref.load %arg1[%c25] : memref<146xf32, #tpu.memory_space<smem>>
    %121 = vector.broadcast %120 : f32 to vector<2x9xf32>
    %122 = arith.mulf %121, %28 : vector<2x9xf32>
    %123 = arith.addf %119, %122 : vector<2x9xf32>
    %c26 = arith.constant 26 : index
    %124 = memref.load %arg1[%c26] : memref<146xf32, #tpu.memory_space<smem>>
    %125 = vector.broadcast %124 : f32 to vector<2x9xf32>
    %126 = arith.mulf %125, %40 : vector<2x9xf32>
    %127 = arith.addf %123, %126 : vector<2x9xf32>
    %c27 = arith.constant 27 : index
    %128 = memref.load %arg1[%c27] : memref<146xf32, #tpu.memory_space<smem>>
    %129 = vector.broadcast %128 : f32 to vector<2x9xf32>
    %130 = arith.mulf %129, %52 : vector<2x9xf32>
    %131 = arith.addf %127, %130 : vector<2x9xf32>
    %c45 = arith.constant 45 : index
    %132 = memref.load %arg1[%c45] : memref<146xf32, #tpu.memory_space<smem>>
    %133 = vector.broadcast %132 : f32 to vector<2x9xf32>
    %134 = arith.addf %131, %133 : vector<2x9xf32>
    %cst_7 = arith.constant 0.000000e+00 : f32
    %135 = vector.broadcast %cst_7 : f32 to vector<2x9xf32>
    %136 = arith.maximumf %134, %135 : vector<2x9xf32>
    %c28 = arith.constant 28 : index
    %137 = memref.load %arg1[%c28] : memref<146xf32, #tpu.memory_space<smem>>
    %138 = vector.broadcast %137 : f32 to vector<2x9xf32>
    %139 = arith.mulf %138, %55 : vector<2x9xf32>
    %c29 = arith.constant 29 : index
    %140 = memref.load %arg1[%c29] : memref<146xf32, #tpu.memory_space<smem>>
    %141 = vector.broadcast %140 : f32 to vector<2x9xf32>
    %142 = arith.mulf %141, %58 : vector<2x9xf32>
    %143 = arith.addf %139, %142 : vector<2x9xf32>
    %c30 = arith.constant 30 : index
    %144 = memref.load %arg1[%c30] : memref<146xf32, #tpu.memory_space<smem>>
    %145 = vector.broadcast %144 : f32 to vector<2x9xf32>
    %146 = arith.mulf %145, %61 : vector<2x9xf32>
    %147 = arith.addf %143, %146 : vector<2x9xf32>
    %c31 = arith.constant 31 : index
    %148 = memref.load %arg1[%c31] : memref<146xf32, #tpu.memory_space<smem>>
    %149 = vector.broadcast %148 : f32 to vector<2x9xf32>
    %150 = arith.mulf %149, %64 : vector<2x9xf32>
    %151 = arith.addf %147, %150 : vector<2x9xf32>
    %c32 = arith.constant 32 : index
    %152 = memref.load %arg1[%c32] : memref<146xf32, #tpu.memory_space<smem>>
    %153 = vector.broadcast %152 : f32 to vector<2x9xf32>
    %154 = arith.mulf %153, %16 : vector<2x9xf32>
    %155 = arith.addf %151, %154 : vector<2x9xf32>
    %c33 = arith.constant 33 : index
    %156 = memref.load %arg1[%c33] : memref<146xf32, #tpu.memory_space<smem>>
    %157 = vector.broadcast %156 : f32 to vector<2x9xf32>
    %158 = arith.mulf %157, %28 : vector<2x9xf32>
    %159 = arith.addf %155, %158 : vector<2x9xf32>
    %c34 = arith.constant 34 : index
    %160 = memref.load %arg1[%c34] : memref<146xf32, #tpu.memory_space<smem>>
    %161 = vector.broadcast %160 : f32 to vector<2x9xf32>
    %162 = arith.mulf %161, %40 : vector<2x9xf32>
    %163 = arith.addf %159, %162 : vector<2x9xf32>
    %c35 = arith.constant 35 : index
    %164 = memref.load %arg1[%c35] : memref<146xf32, #tpu.memory_space<smem>>
    %165 = vector.broadcast %164 : f32 to vector<2x9xf32>
    %166 = arith.mulf %165, %52 : vector<2x9xf32>
    %167 = arith.addf %163, %166 : vector<2x9xf32>
    %c46 = arith.constant 46 : index
    %168 = memref.load %arg1[%c46] : memref<146xf32, #tpu.memory_space<smem>>
    %169 = vector.broadcast %168 : f32 to vector<2x9xf32>
    %170 = arith.addf %167, %169 : vector<2x9xf32>
    %cst_8 = arith.constant 0.000000e+00 : f32
    %171 = vector.broadcast %cst_8 : f32 to vector<2x9xf32>
    %172 = arith.maximumf %170, %171 : vector<2x9xf32>
    %c36 = arith.constant 36 : index
    %173 = memref.load %arg1[%c36] : memref<146xf32, #tpu.memory_space<smem>>
    %174 = vector.broadcast %173 : f32 to vector<2x9xf32>
    %175 = arith.mulf %174, %55 : vector<2x9xf32>
    %c37 = arith.constant 37 : index
    %176 = memref.load %arg1[%c37] : memref<146xf32, #tpu.memory_space<smem>>
    %177 = vector.broadcast %176 : f32 to vector<2x9xf32>
    %178 = arith.mulf %177, %58 : vector<2x9xf32>
    %179 = arith.addf %175, %178 : vector<2x9xf32>
    %c38 = arith.constant 38 : index
    %180 = memref.load %arg1[%c38] : memref<146xf32, #tpu.memory_space<smem>>
    %181 = vector.broadcast %180 : f32 to vector<2x9xf32>
    %182 = arith.mulf %181, %61 : vector<2x9xf32>
    %183 = arith.addf %179, %182 : vector<2x9xf32>
    %c39 = arith.constant 39 : index
    %184 = memref.load %arg1[%c39] : memref<146xf32, #tpu.memory_space<smem>>
    %185 = vector.broadcast %184 : f32 to vector<2x9xf32>
    %186 = arith.mulf %185, %64 : vector<2x9xf32>
    %187 = arith.addf %183, %186 : vector<2x9xf32>
    %c40 = arith.constant 40 : index
    %188 = memref.load %arg1[%c40] : memref<146xf32, #tpu.memory_space<smem>>
    %189 = vector.broadcast %188 : f32 to vector<2x9xf32>
    %190 = arith.mulf %189, %16 : vector<2x9xf32>
    %191 = arith.addf %187, %190 : vector<2x9xf32>
    %c41 = arith.constant 41 : index
    %192 = memref.load %arg1[%c41] : memref<146xf32, #tpu.memory_space<smem>>
    %193 = vector.broadcast %192 : f32 to vector<2x9xf32>
    %194 = arith.mulf %193, %28 : vector<2x9xf32>
    %195 = arith.addf %191, %194 : vector<2x9xf32>
    %c42 = arith.constant 42 : index
    %196 = memref.load %arg1[%c42] : memref<146xf32, #tpu.memory_space<smem>>
    %197 = vector.broadcast %196 : f32 to vector<2x9xf32>
    %198 = arith.mulf %197, %40 : vector<2x9xf32>
    %199 = arith.addf %195, %198 : vector<2x9xf32>
    %c43 = arith.constant 43 : index
    %200 = memref.load %arg1[%c43] : memref<146xf32, #tpu.memory_space<smem>>
    %201 = vector.broadcast %200 : f32 to vector<2x9xf32>
    %202 = arith.mulf %201, %52 : vector<2x9xf32>
    %203 = arith.addf %199, %202 : vector<2x9xf32>
    %c47 = arith.constant 47 : index
    %204 = memref.load %arg1[%c47] : memref<146xf32, #tpu.memory_space<smem>>
    %205 = vector.broadcast %204 : f32 to vector<2x9xf32>
    %206 = arith.addf %203, %205 : vector<2x9xf32>
    %cst_9 = arith.constant 0.000000e+00 : f32
    %207 = vector.broadcast %cst_9 : f32 to vector<2x9xf32>
    %208 = arith.maximumf %206, %207 : vector<2x9xf32>
    %c48 = arith.constant 48 : index
    %209 = memref.load %arg1[%c48] : memref<146xf32, #tpu.memory_space<smem>>
    %210 = vector.broadcast %209 : f32 to vector<2x9xf32>
    %211 = arith.mulf %210, %1 : vector<2x9xf32>
    %c52 = arith.constant 52 : index
    %212 = memref.load %arg1[%c52] : memref<146xf32, #tpu.memory_space<smem>>
    %213 = vector.broadcast %212 : f32 to vector<2x9xf32>
    %214 = arith.addf %211, %213 : vector<2x9xf32>
    %c49 = arith.constant 49 : index
    %215 = memref.load %arg1[%c49] : memref<146xf32, #tpu.memory_space<smem>>
    %216 = vector.broadcast %215 : f32 to vector<2x9xf32>
    %217 = arith.mulf %216, %1 : vector<2x9xf32>
    %c53 = arith.constant 53 : index
    %218 = memref.load %arg1[%c53] : memref<146xf32, #tpu.memory_space<smem>>
    %219 = vector.broadcast %218 : f32 to vector<2x9xf32>
    %220 = arith.addf %217, %219 : vector<2x9xf32>
    %c50 = arith.constant 50 : index
    %221 = memref.load %arg1[%c50] : memref<146xf32, #tpu.memory_space<smem>>
    %222 = vector.broadcast %221 : f32 to vector<2x9xf32>
    %223 = arith.mulf %222, %1 : vector<2x9xf32>
    %c54 = arith.constant 54 : index
    %224 = memref.load %arg1[%c54] : memref<146xf32, #tpu.memory_space<smem>>
    %225 = vector.broadcast %224 : f32 to vector<2x9xf32>
    %226 = arith.addf %223, %225 : vector<2x9xf32>
    %c51 = arith.constant 51 : index
    %227 = memref.load %arg1[%c51] : memref<146xf32, #tpu.memory_space<smem>>
    %228 = vector.broadcast %227 : f32 to vector<2x9xf32>
    %229 = arith.mulf %228, %1 : vector<2x9xf32>
    %c55 = arith.constant 55 : index
    %230 = memref.load %arg1[%c55] : memref<146xf32, #tpu.memory_space<smem>>
    %231 = vector.broadcast %230 : f32 to vector<2x9xf32>
    %232 = arith.addf %229, %231 : vector<2x9xf32>
    %233 = arith.addf %100, %214 : vector<2x9xf32>
    %cst_10 = arith.constant 0.000000e+00 : f32
    %234 = vector.broadcast %cst_10 : f32 to vector<2x9xf32>
    %235 = arith.maximumf %233, %234 : vector<2x9xf32>
    %236 = arith.addf %136, %220 : vector<2x9xf32>
    %cst_11 = arith.constant 0.000000e+00 : f32
    %237 = vector.broadcast %cst_11 : f32 to vector<2x9xf32>
    %238 = arith.maximumf %236, %237 : vector<2x9xf32>
    %239 = arith.addf %172, %226 : vector<2x9xf32>
    %cst_12 = arith.constant 0.000000e+00 : f32
    %240 = vector.broadcast %cst_12 : f32 to vector<2x9xf32>
    %241 = arith.maximumf %239, %240 : vector<2x9xf32>
    %242 = arith.addf %208, %232 : vector<2x9xf32>
    %cst_13 = arith.constant 0.000000e+00 : f32
    %243 = vector.broadcast %cst_13 : f32 to vector<2x9xf32>
    %244 = arith.maximumf %242, %243 : vector<2x9xf32>
    %245 = vector.extract_strided_slice %235 {offsets = [0, 0], sizes = [2, 1], strides = [1, 1]} : vector<2x9xf32> to vector<2x1xf32>
    %246 = vector.shape_cast %245 : vector<2x1xf32> to vector<2x1xf32>
    %247 = vector.broadcast %246 : vector<2x1xf32> to vector<2x2xf32>
    %248 = vector.extract_strided_slice %235 {offsets = [0, 0], sizes = [2, 7], strides = [1, 1]} : vector<2x9xf32> to vector<2x7xf32>
    %249 = tpu.concatenate %247, %248 in 1 : vector<2x2xf32>, vector<2x7xf32> -> vector<2x9xf32>
    %250 = vector.extract_strided_slice %238 {offsets = [0, 0], sizes = [2, 1], strides = [1, 1]} : vector<2x9xf32> to vector<2x1xf32>
    %251 = vector.shape_cast %250 : vector<2x1xf32> to vector<2x1xf32>
    %252 = vector.broadcast %251 : vector<2x1xf32> to vector<2x2xf32>
    %253 = vector.extract_strided_slice %238 {offsets = [0, 0], sizes = [2, 7], strides = [1, 1]} : vector<2x9xf32> to vector<2x7xf32>
    %254 = tpu.concatenate %252, %253 in 1 : vector<2x2xf32>, vector<2x7xf32> -> vector<2x9xf32>
    %255 = vector.extract_strided_slice %241 {offsets = [0, 0], sizes = [2, 1], strides = [1, 1]} : vector<2x9xf32> to vector<2x1xf32>
    %256 = vector.shape_cast %255 : vector<2x1xf32> to vector<2x1xf32>
    %257 = vector.broadcast %256 : vector<2x1xf32> to vector<2x2xf32>
    %258 = vector.extract_strided_slice %241 {offsets = [0, 0], sizes = [2, 7], strides = [1, 1]} : vector<2x9xf32> to vector<2x7xf32>
    %259 = tpu.concatenate %257, %258 in 1 : vector<2x2xf32>, vector<2x7xf32> -> vector<2x9xf32>
    %260 = vector.extract_strided_slice %244 {offsets = [0, 0], sizes = [2, 1], strides = [1, 1]} : vector<2x9xf32> to vector<2x1xf32>
    %261 = vector.shape_cast %260 : vector<2x1xf32> to vector<2x1xf32>
    %262 = vector.broadcast %261 : vector<2x1xf32> to vector<2x2xf32>
    %263 = vector.extract_strided_slice %244 {offsets = [0, 0], sizes = [2, 7], strides = [1, 1]} : vector<2x9xf32> to vector<2x7xf32>
    %264 = tpu.concatenate %262, %263 in 1 : vector<2x2xf32>, vector<2x7xf32> -> vector<2x9xf32>
    %c56 = arith.constant 56 : index
    %265 = memref.load %arg1[%c56] : memref<146xf32, #tpu.memory_space<smem>>
    %266 = vector.broadcast %265 : f32 to vector<2x9xf32>
    %267 = arith.mulf %266, %249 : vector<2x9xf32>
    %c57 = arith.constant 57 : index
    %268 = memref.load %arg1[%c57] : memref<146xf32, #tpu.memory_space<smem>>
    %269 = vector.broadcast %268 : f32 to vector<2x9xf32>
    %270 = arith.mulf %269, %254 : vector<2x9xf32>
    %271 = arith.addf %267, %270 : vector<2x9xf32>
    %c58 = arith.constant 58 : index
    %272 = memref.load %arg1[%c58] : memref<146xf32, #tpu.memory_space<smem>>
    %273 = vector.broadcast %272 : f32 to vector<2x9xf32>
    %274 = arith.mulf %273, %259 : vector<2x9xf32>
    %275 = arith.addf %271, %274 : vector<2x9xf32>
    %c59 = arith.constant 59 : index
    %276 = memref.load %arg1[%c59] : memref<146xf32, #tpu.memory_space<smem>>
    %277 = vector.broadcast %276 : f32 to vector<2x9xf32>
    %278 = arith.mulf %277, %264 : vector<2x9xf32>
    %279 = arith.addf %275, %278 : vector<2x9xf32>
    %c60 = arith.constant 60 : index
    %280 = memref.load %arg1[%c60] : memref<146xf32, #tpu.memory_space<smem>>
    %281 = vector.broadcast %280 : f32 to vector<2x9xf32>
    %282 = arith.mulf %281, %235 : vector<2x9xf32>
    %283 = arith.addf %279, %282 : vector<2x9xf32>
    %c61 = arith.constant 61 : index
    %284 = memref.load %arg1[%c61] : memref<146xf32, #tpu.memory_space<smem>>
    %285 = vector.broadcast %284 : f32 to vector<2x9xf32>
    %286 = arith.mulf %285, %238 : vector<2x9xf32>
    %287 = arith.addf %283, %286 : vector<2x9xf32>
    %c62 = arith.constant 62 : index
    %288 = memref.load %arg1[%c62] : memref<146xf32, #tpu.memory_space<smem>>
    %289 = vector.broadcast %288 : f32 to vector<2x9xf32>
    %290 = arith.mulf %289, %241 : vector<2x9xf32>
    %291 = arith.addf %287, %290 : vector<2x9xf32>
    %c63 = arith.constant 63 : index
    %292 = memref.load %arg1[%c63] : memref<146xf32, #tpu.memory_space<smem>>
    %293 = vector.broadcast %292 : f32 to vector<2x9xf32>
    %294 = arith.mulf %293, %244 : vector<2x9xf32>
    %295 = arith.addf %291, %294 : vector<2x9xf32>
    %c64 = arith.constant 64 : index
    %296 = memref.load %arg1[%c64] : memref<146xf32, #tpu.memory_space<smem>>
    %297 = vector.broadcast %296 : f32 to vector<2x9xf32>
    %298 = arith.addf %295, %297 : vector<2x9xf32>
    %cst_14 = arith.constant 0.000000e+00 : f32
    %299 = vector.broadcast %cst_14 : f32 to vector<2x9xf32>
    %300 = arith.maximumf %298, %299 : vector<2x9xf32>
    %301 = vector.extract_strided_slice %300 {offsets = [0, 0], sizes = [2, 1], strides = [1, 1]} : vector<2x9xf32> to vector<2x1xf32>
    %302 = vector.shape_cast %301 : vector<2x1xf32> to vector<2x1xf32>
    %303 = vector.broadcast %302 : vector<2x1xf32> to vector<2x2xf32>
    %304 = vector.extract_strided_slice %300 {offsets = [0, 0], sizes = [2, 7], strides = [1, 1]} : vector<2x9xf32> to vector<2x7xf32>
    %305 = tpu.concatenate %303, %304 in 1 : vector<2x2xf32>, vector<2x7xf32> -> vector<2x9xf32>
    %c65 = arith.constant 65 : index
    %306 = memref.load %arg1[%c65] : memref<146xf32, #tpu.memory_space<smem>>
    %307 = vector.broadcast %306 : f32 to vector<2x9xf32>
    %308 = arith.mulf %307, %305 : vector<2x9xf32>
    %c66 = arith.constant 66 : index
    %309 = memref.load %arg1[%c66] : memref<146xf32, #tpu.memory_space<smem>>
    %310 = vector.broadcast %309 : f32 to vector<2x9xf32>
    %311 = arith.mulf %310, %300 : vector<2x9xf32>
    %312 = arith.addf %308, %311 : vector<2x9xf32>
    %c67 = arith.constant 67 : index
    %313 = memref.load %arg1[%c67] : memref<146xf32, #tpu.memory_space<smem>>
    %314 = vector.broadcast %313 : f32 to vector<2x9xf32>
    %315 = arith.addf %312, %314 : vector<2x9xf32>
    %cst_15 = arith.constant 0.000000e+00 : f32
    %316 = vector.broadcast %cst_15 : f32 to vector<2x9xf32>
    %317 = arith.maximumf %315, %316 : vector<2x9xf32>
    %c68 = arith.constant 68 : index
    %318 = memref.load %arg1[%c68] : memref<146xf32, #tpu.memory_space<smem>>
    %319 = vector.broadcast %318 : f32 to vector<2x9xf32>
    %320 = arith.mulf %319, %235 : vector<2x9xf32>
    %c69 = arith.constant 69 : index
    %321 = memref.load %arg1[%c69] : memref<146xf32, #tpu.memory_space<smem>>
    %322 = vector.broadcast %321 : f32 to vector<2x9xf32>
    %323 = arith.mulf %322, %238 : vector<2x9xf32>
    %324 = arith.addf %320, %323 : vector<2x9xf32>
    %c70 = arith.constant 70 : index
    %325 = memref.load %arg1[%c70] : memref<146xf32, #tpu.memory_space<smem>>
    %326 = vector.broadcast %325 : f32 to vector<2x9xf32>
    %327 = arith.mulf %326, %241 : vector<2x9xf32>
    %328 = arith.addf %324, %327 : vector<2x9xf32>
    %c71 = arith.constant 71 : index
    %329 = memref.load %arg1[%c71] : memref<146xf32, #tpu.memory_space<smem>>
    %330 = vector.broadcast %329 : f32 to vector<2x9xf32>
    %331 = arith.mulf %330, %244 : vector<2x9xf32>
    %332 = arith.addf %328, %331 : vector<2x9xf32>
    %c72 = arith.constant 72 : index
    %333 = memref.load %arg1[%c72] : memref<146xf32, #tpu.memory_space<smem>>
    %334 = vector.broadcast %333 : f32 to vector<2x9xf32>
    %335 = arith.addf %332, %334 : vector<2x9xf32>
    %336 = arith.addf %317, %335 : vector<2x9xf32>
    %cst_16 = arith.constant 0.000000e+00 : f32
    %337 = vector.broadcast %cst_16 : f32 to vector<2x9xf32>
    %338 = arith.maximumf %336, %337 : vector<2x9xf32>
    %339 = arith.addf %338, %1 : vector<2x9xf32>
    %340 = vector.extract_strided_slice %339 {offsets = [0, 0], sizes = [2, 1], strides = [1, 1]} : vector<2x9xf32> to vector<2x1xf32>
    %341 = vector.extract_strided_slice %339 {offsets = [0, 0], sizes = [2, 8], strides = [1, 1]} : vector<2x9xf32> to vector<2x8xf32>
    %342 = tpu.concatenate %340, %341 in 1 : vector<2x1xf32>, vector<2x8xf32> -> vector<2x9xf32>
    %c73 = arith.constant 73 : index
    %343 = memref.load %arg1[%c73] : memref<146xf32, #tpu.memory_space<smem>>
    %344 = vector.broadcast %343 : f32 to vector<2x9xf32>
    %345 = arith.mulf %344, %342 : vector<2x9xf32>
    %c74 = arith.constant 74 : index
    %346 = memref.load %arg1[%c74] : memref<146xf32, #tpu.memory_space<smem>>
    %347 = vector.broadcast %346 : f32 to vector<2x9xf32>
    %348 = arith.mulf %347, %339 : vector<2x9xf32>
    %349 = arith.addf %345, %348 : vector<2x9xf32>
    %c81 = arith.constant 81 : index
    %350 = memref.load %arg1[%c81] : memref<146xf32, #tpu.memory_space<smem>>
    %351 = vector.broadcast %350 : f32 to vector<2x9xf32>
    %352 = arith.addf %349, %351 : vector<2x9xf32>
    %cst_17 = arith.constant 0.000000e+00 : f32
    %353 = vector.broadcast %cst_17 : f32 to vector<2x9xf32>
    %354 = arith.maximumf %352, %353 : vector<2x9xf32>
    %c75 = arith.constant 75 : index
    %355 = memref.load %arg1[%c75] : memref<146xf32, #tpu.memory_space<smem>>
    %356 = vector.broadcast %355 : f32 to vector<2x9xf32>
    %357 = arith.mulf %356, %342 : vector<2x9xf32>
    %c76 = arith.constant 76 : index
    %358 = memref.load %arg1[%c76] : memref<146xf32, #tpu.memory_space<smem>>
    %359 = vector.broadcast %358 : f32 to vector<2x9xf32>
    %360 = arith.mulf %359, %339 : vector<2x9xf32>
    %361 = arith.addf %357, %360 : vector<2x9xf32>
    %c82 = arith.constant 82 : index
    %362 = memref.load %arg1[%c82] : memref<146xf32, #tpu.memory_space<smem>>
    %363 = vector.broadcast %362 : f32 to vector<2x9xf32>
    %364 = arith.addf %361, %363 : vector<2x9xf32>
    %cst_18 = arith.constant 0.000000e+00 : f32
    %365 = vector.broadcast %cst_18 : f32 to vector<2x9xf32>
    %366 = arith.maximumf %364, %365 : vector<2x9xf32>
    %c77 = arith.constant 77 : index
    %367 = memref.load %arg1[%c77] : memref<146xf32, #tpu.memory_space<smem>>
    %368 = vector.broadcast %367 : f32 to vector<2x9xf32>
    %369 = arith.mulf %368, %342 : vector<2x9xf32>
    %c78 = arith.constant 78 : index
    %370 = memref.load %arg1[%c78] : memref<146xf32, #tpu.memory_space<smem>>
    %371 = vector.broadcast %370 : f32 to vector<2x9xf32>
    %372 = arith.mulf %371, %339 : vector<2x9xf32>
    %373 = arith.addf %369, %372 : vector<2x9xf32>
    %c83 = arith.constant 83 : index
    %374 = memref.load %arg1[%c83] : memref<146xf32, #tpu.memory_space<smem>>
    %375 = vector.broadcast %374 : f32 to vector<2x9xf32>
    %376 = arith.addf %373, %375 : vector<2x9xf32>
    %cst_19 = arith.constant 0.000000e+00 : f32
    %377 = vector.broadcast %cst_19 : f32 to vector<2x9xf32>
    %378 = arith.maximumf %376, %377 : vector<2x9xf32>
    %c79 = arith.constant 79 : index
    %379 = memref.load %arg1[%c79] : memref<146xf32, #tpu.memory_space<smem>>
    %380 = vector.broadcast %379 : f32 to vector<2x9xf32>
    %381 = arith.mulf %380, %342 : vector<2x9xf32>
    %c80 = arith.constant 80 : index
    %382 = memref.load %arg1[%c80] : memref<146xf32, #tpu.memory_space<smem>>
    %383 = vector.broadcast %382 : f32 to vector<2x9xf32>
    %384 = arith.mulf %383, %339 : vector<2x9xf32>
    %385 = arith.addf %381, %384 : vector<2x9xf32>
    %c84 = arith.constant 84 : index
    %386 = memref.load %arg1[%c84] : memref<146xf32, #tpu.memory_space<smem>>
    %387 = vector.broadcast %386 : f32 to vector<2x9xf32>
    %388 = arith.addf %385, %387 : vector<2x9xf32>
    %cst_20 = arith.constant 0.000000e+00 : f32
    %389 = vector.broadcast %cst_20 : f32 to vector<2x9xf32>
    %390 = arith.maximumf %388, %389 : vector<2x9xf32>
    %391 = vector.extract_strided_slice %354 {offsets = [0, 0], sizes = [2, 1], strides = [1, 1]} : vector<2x9xf32> to vector<2x1xf32>
    %392 = vector.extract_strided_slice %354 {offsets = [0, 0], sizes = [2, 8], strides = [1, 1]} : vector<2x9xf32> to vector<2x8xf32>
    %393 = tpu.concatenate %391, %392 in 1 : vector<2x1xf32>, vector<2x8xf32> -> vector<2x9xf32>
    %394 = vector.extract_strided_slice %366 {offsets = [0, 0], sizes = [2, 1], strides = [1, 1]} : vector<2x9xf32> to vector<2x1xf32>
    %395 = vector.extract_strided_slice %366 {offsets = [0, 0], sizes = [2, 8], strides = [1, 1]} : vector<2x9xf32> to vector<2x8xf32>
    %396 = tpu.concatenate %394, %395 in 1 : vector<2x1xf32>, vector<2x8xf32> -> vector<2x9xf32>
    %397 = vector.extract_strided_slice %378 {offsets = [0, 0], sizes = [2, 1], strides = [1, 1]} : vector<2x9xf32> to vector<2x1xf32>
    %398 = vector.extract_strided_slice %378 {offsets = [0, 0], sizes = [2, 8], strides = [1, 1]} : vector<2x9xf32> to vector<2x8xf32>
    %399 = tpu.concatenate %397, %398 in 1 : vector<2x1xf32>, vector<2x8xf32> -> vector<2x9xf32>
    %400 = vector.extract_strided_slice %390 {offsets = [0, 0], sizes = [2, 1], strides = [1, 1]} : vector<2x9xf32> to vector<2x1xf32>
    %401 = vector.extract_strided_slice %390 {offsets = [0, 0], sizes = [2, 8], strides = [1, 1]} : vector<2x9xf32> to vector<2x8xf32>
    %402 = tpu.concatenate %400, %401 in 1 : vector<2x1xf32>, vector<2x8xf32> -> vector<2x9xf32>
    %c85 = arith.constant 85 : index
    %403 = memref.load %arg1[%c85] : memref<146xf32, #tpu.memory_space<smem>>
    %404 = vector.broadcast %403 : f32 to vector<2x9xf32>
    %405 = arith.mulf %404, %393 : vector<2x9xf32>
    %c86 = arith.constant 86 : index
    %406 = memref.load %arg1[%c86] : memref<146xf32, #tpu.memory_space<smem>>
    %407 = vector.broadcast %406 : f32 to vector<2x9xf32>
    %408 = arith.mulf %407, %396 : vector<2x9xf32>
    %409 = arith.addf %405, %408 : vector<2x9xf32>
    %c87 = arith.constant 87 : index
    %410 = memref.load %arg1[%c87] : memref<146xf32, #tpu.memory_space<smem>>
    %411 = vector.broadcast %410 : f32 to vector<2x9xf32>
    %412 = arith.mulf %411, %399 : vector<2x9xf32>
    %413 = arith.addf %409, %412 : vector<2x9xf32>
    %c88 = arith.constant 88 : index
    %414 = memref.load %arg1[%c88] : memref<146xf32, #tpu.memory_space<smem>>
    %415 = vector.broadcast %414 : f32 to vector<2x9xf32>
    %416 = arith.mulf %415, %402 : vector<2x9xf32>
    %417 = arith.addf %413, %416 : vector<2x9xf32>
    %c89 = arith.constant 89 : index
    %418 = memref.load %arg1[%c89] : memref<146xf32, #tpu.memory_space<smem>>
    %419 = vector.broadcast %418 : f32 to vector<2x9xf32>
    %420 = arith.mulf %419, %354 : vector<2x9xf32>
    %421 = arith.addf %417, %420 : vector<2x9xf32>
    %c90 = arith.constant 90 : index
    %422 = memref.load %arg1[%c90] : memref<146xf32, #tpu.memory_space<smem>>
    %423 = vector.broadcast %422 : f32 to vector<2x9xf32>
    %424 = arith.mulf %423, %366 : vector<2x9xf32>
    %425 = arith.addf %421, %424 : vector<2x9xf32>
    %c91 = arith.constant 91 : index
    %426 = memref.load %arg1[%c91] : memref<146xf32, #tpu.memory_space<smem>>
    %427 = vector.broadcast %426 : f32 to vector<2x9xf32>
    %428 = arith.mulf %427, %378 : vector<2x9xf32>
    %429 = arith.addf %425, %428 : vector<2x9xf32>
    %c92 = arith.constant 92 : index
    %430 = memref.load %arg1[%c92] : memref<146xf32, #tpu.memory_space<smem>>
    %431 = vector.broadcast %430 : f32 to vector<2x9xf32>
    %432 = arith.mulf %431, %390 : vector<2x9xf32>
    %433 = arith.addf %429, %432 : vector<2x9xf32>
    %c117 = arith.constant 117 : index
    %434 = memref.load %arg1[%c117] : memref<146xf32, #tpu.memory_space<smem>>
    %435 = vector.broadcast %434 : f32 to vector<2x9xf32>
    %436 = arith.addf %433, %435 : vector<2x9xf32>
    %cst_21 = arith.constant 0.000000e+00 : f32
    %437 = vector.broadcast %cst_21 : f32 to vector<2x9xf32>
    %438 = arith.maximumf %436, %437 : vector<2x9xf32>
    %c93 = arith.constant 93 : index
    %439 = memref.load %arg1[%c93] : memref<146xf32, #tpu.memory_space<smem>>
    %440 = vector.broadcast %439 : f32 to vector<2x9xf32>
    %441 = arith.mulf %440, %393 : vector<2x9xf32>
    %c94 = arith.constant 94 : index
    %442 = memref.load %arg1[%c94] : memref<146xf32, #tpu.memory_space<smem>>
    %443 = vector.broadcast %442 : f32 to vector<2x9xf32>
    %444 = arith.mulf %443, %396 : vector<2x9xf32>
    %445 = arith.addf %441, %444 : vector<2x9xf32>
    %c95 = arith.constant 95 : index
    %446 = memref.load %arg1[%c95] : memref<146xf32, #tpu.memory_space<smem>>
    %447 = vector.broadcast %446 : f32 to vector<2x9xf32>
    %448 = arith.mulf %447, %399 : vector<2x9xf32>
    %449 = arith.addf %445, %448 : vector<2x9xf32>
    %c96 = arith.constant 96 : index
    %450 = memref.load %arg1[%c96] : memref<146xf32, #tpu.memory_space<smem>>
    %451 = vector.broadcast %450 : f32 to vector<2x9xf32>
    %452 = arith.mulf %451, %402 : vector<2x9xf32>
    %453 = arith.addf %449, %452 : vector<2x9xf32>
    %c97 = arith.constant 97 : index
    %454 = memref.load %arg1[%c97] : memref<146xf32, #tpu.memory_space<smem>>
    %455 = vector.broadcast %454 : f32 to vector<2x9xf32>
    %456 = arith.mulf %455, %354 : vector<2x9xf32>
    %457 = arith.addf %453, %456 : vector<2x9xf32>
    %c98 = arith.constant 98 : index
    %458 = memref.load %arg1[%c98] : memref<146xf32, #tpu.memory_space<smem>>
    %459 = vector.broadcast %458 : f32 to vector<2x9xf32>
    %460 = arith.mulf %459, %366 : vector<2x9xf32>
    %461 = arith.addf %457, %460 : vector<2x9xf32>
    %c99 = arith.constant 99 : index
    %462 = memref.load %arg1[%c99] : memref<146xf32, #tpu.memory_space<smem>>
    %463 = vector.broadcast %462 : f32 to vector<2x9xf32>
    %464 = arith.mulf %463, %378 : vector<2x9xf32>
    %465 = arith.addf %461, %464 : vector<2x9xf32>
    %c100 = arith.constant 100 : index
    %466 = memref.load %arg1[%c100] : memref<146xf32, #tpu.memory_space<smem>>
    %467 = vector.broadcast %466 : f32 to vector<2x9xf32>
    %468 = arith.mulf %467, %390 : vector<2x9xf32>
    %469 = arith.addf %465, %468 : vector<2x9xf32>
    %c118 = arith.constant 118 : index
    %470 = memref.load %arg1[%c118] : memref<146xf32, #tpu.memory_space<smem>>
    %471 = vector.broadcast %470 : f32 to vector<2x9xf32>
    %472 = arith.addf %469, %471 : vector<2x9xf32>
    %cst_22 = arith.constant 0.000000e+00 : f32
    %473 = vector.broadcast %cst_22 : f32 to vector<2x9xf32>
    %474 = arith.maximumf %472, %473 : vector<2x9xf32>
    %c101 = arith.constant 101 : index
    %475 = memref.load %arg1[%c101] : memref<146xf32, #tpu.memory_space<smem>>
    %476 = vector.broadcast %475 : f32 to vector<2x9xf32>
    %477 = arith.mulf %476, %393 : vector<2x9xf32>
    %c102 = arith.constant 102 : index
    %478 = memref.load %arg1[%c102] : memref<146xf32, #tpu.memory_space<smem>>
    %479 = vector.broadcast %478 : f32 to vector<2x9xf32>
    %480 = arith.mulf %479, %396 : vector<2x9xf32>
    %481 = arith.addf %477, %480 : vector<2x9xf32>
    %c103 = arith.constant 103 : index
    %482 = memref.load %arg1[%c103] : memref<146xf32, #tpu.memory_space<smem>>
    %483 = vector.broadcast %482 : f32 to vector<2x9xf32>
    %484 = arith.mulf %483, %399 : vector<2x9xf32>
    %485 = arith.addf %481, %484 : vector<2x9xf32>
    %c104 = arith.constant 104 : index
    %486 = memref.load %arg1[%c104] : memref<146xf32, #tpu.memory_space<smem>>
    %487 = vector.broadcast %486 : f32 to vector<2x9xf32>
    %488 = arith.mulf %487, %402 : vector<2x9xf32>
    %489 = arith.addf %485, %488 : vector<2x9xf32>
    %c105 = arith.constant 105 : index
    %490 = memref.load %arg1[%c105] : memref<146xf32, #tpu.memory_space<smem>>
    %491 = vector.broadcast %490 : f32 to vector<2x9xf32>
    %492 = arith.mulf %491, %354 : vector<2x9xf32>
    %493 = arith.addf %489, %492 : vector<2x9xf32>
    %c106 = arith.constant 106 : index
    %494 = memref.load %arg1[%c106] : memref<146xf32, #tpu.memory_space<smem>>
    %495 = vector.broadcast %494 : f32 to vector<2x9xf32>
    %496 = arith.mulf %495, %366 : vector<2x9xf32>
    %497 = arith.addf %493, %496 : vector<2x9xf32>
    %c107 = arith.constant 107 : index
    %498 = memref.load %arg1[%c107] : memref<146xf32, #tpu.memory_space<smem>>
    %499 = vector.broadcast %498 : f32 to vector<2x9xf32>
    %500 = arith.mulf %499, %378 : vector<2x9xf32>
    %501 = arith.addf %497, %500 : vector<2x9xf32>
    %c108 = arith.constant 108 : index
    %502 = memref.load %arg1[%c108] : memref<146xf32, #tpu.memory_space<smem>>
    %503 = vector.broadcast %502 : f32 to vector<2x9xf32>
    %504 = arith.mulf %503, %390 : vector<2x9xf32>
    %505 = arith.addf %501, %504 : vector<2x9xf32>
    %c119 = arith.constant 119 : index
    %506 = memref.load %arg1[%c119] : memref<146xf32, #tpu.memory_space<smem>>
    %507 = vector.broadcast %506 : f32 to vector<2x9xf32>
    %508 = arith.addf %505, %507 : vector<2x9xf32>
    %cst_23 = arith.constant 0.000000e+00 : f32
    %509 = vector.broadcast %cst_23 : f32 to vector<2x9xf32>
    %510 = arith.maximumf %508, %509 : vector<2x9xf32>
    %c109 = arith.constant 109 : index
    %511 = memref.load %arg1[%c109] : memref<146xf32, #tpu.memory_space<smem>>
    %512 = vector.broadcast %511 : f32 to vector<2x9xf32>
    %513 = arith.mulf %512, %393 : vector<2x9xf32>
    %c110 = arith.constant 110 : index
    %514 = memref.load %arg1[%c110] : memref<146xf32, #tpu.memory_space<smem>>
    %515 = vector.broadcast %514 : f32 to vector<2x9xf32>
    %516 = arith.mulf %515, %396 : vector<2x9xf32>
    %517 = arith.addf %513, %516 : vector<2x9xf32>
    %c111 = arith.constant 111 : index
    %518 = memref.load %arg1[%c111] : memref<146xf32, #tpu.memory_space<smem>>
    %519 = vector.broadcast %518 : f32 to vector<2x9xf32>
    %520 = arith.mulf %519, %399 : vector<2x9xf32>
    %521 = arith.addf %517, %520 : vector<2x9xf32>
    %c112 = arith.constant 112 : index
    %522 = memref.load %arg1[%c112] : memref<146xf32, #tpu.memory_space<smem>>
    %523 = vector.broadcast %522 : f32 to vector<2x9xf32>
    %524 = arith.mulf %523, %402 : vector<2x9xf32>
    %525 = arith.addf %521, %524 : vector<2x9xf32>
    %c113 = arith.constant 113 : index
    %526 = memref.load %arg1[%c113] : memref<146xf32, #tpu.memory_space<smem>>
    %527 = vector.broadcast %526 : f32 to vector<2x9xf32>
    %528 = arith.mulf %527, %354 : vector<2x9xf32>
    %529 = arith.addf %525, %528 : vector<2x9xf32>
    %c114 = arith.constant 114 : index
    %530 = memref.load %arg1[%c114] : memref<146xf32, #tpu.memory_space<smem>>
    %531 = vector.broadcast %530 : f32 to vector<2x9xf32>
    %532 = arith.mulf %531, %366 : vector<2x9xf32>
    %533 = arith.addf %529, %532 : vector<2x9xf32>
    %c115 = arith.constant 115 : index
    %534 = memref.load %arg1[%c115] : memref<146xf32, #tpu.memory_space<smem>>
    %535 = vector.broadcast %534 : f32 to vector<2x9xf32>
    %536 = arith.mulf %535, %378 : vector<2x9xf32>
    %537 = arith.addf %533, %536 : vector<2x9xf32>
    %c116 = arith.constant 116 : index
    %538 = memref.load %arg1[%c116] : memref<146xf32, #tpu.memory_space<smem>>
    %539 = vector.broadcast %538 : f32 to vector<2x9xf32>
    %540 = arith.mulf %539, %390 : vector<2x9xf32>
    %541 = arith.addf %537, %540 : vector<2x9xf32>
    %c120 = arith.constant 120 : index
    %542 = memref.load %arg1[%c120] : memref<146xf32, #tpu.memory_space<smem>>
    %543 = vector.broadcast %542 : f32 to vector<2x9xf32>
    %544 = arith.addf %541, %543 : vector<2x9xf32>
    %cst_24 = arith.constant 0.000000e+00 : f32
    %545 = vector.broadcast %cst_24 : f32 to vector<2x9xf32>
    %546 = arith.maximumf %544, %545 : vector<2x9xf32>
    %c121 = arith.constant 121 : index
    %547 = memref.load %arg1[%c121] : memref<146xf32, #tpu.memory_space<smem>>
    %548 = vector.broadcast %547 : f32 to vector<2x9xf32>
    %549 = arith.mulf %548, %339 : vector<2x9xf32>
    %c125 = arith.constant 125 : index
    %550 = memref.load %arg1[%c125] : memref<146xf32, #tpu.memory_space<smem>>
    %551 = vector.broadcast %550 : f32 to vector<2x9xf32>
    %552 = arith.addf %549, %551 : vector<2x9xf32>
    %c122 = arith.constant 122 : index
    %553 = memref.load %arg1[%c122] : memref<146xf32, #tpu.memory_space<smem>>
    %554 = vector.broadcast %553 : f32 to vector<2x9xf32>
    %555 = arith.mulf %554, %339 : vector<2x9xf32>
    %c126 = arith.constant 126 : index
    %556 = memref.load %arg1[%c126] : memref<146xf32, #tpu.memory_space<smem>>
    %557 = vector.broadcast %556 : f32 to vector<2x9xf32>
    %558 = arith.addf %555, %557 : vector<2x9xf32>
    %c123 = arith.constant 123 : index
    %559 = memref.load %arg1[%c123] : memref<146xf32, #tpu.memory_space<smem>>
    %560 = vector.broadcast %559 : f32 to vector<2x9xf32>
    %561 = arith.mulf %560, %339 : vector<2x9xf32>
    %c127 = arith.constant 127 : index
    %562 = memref.load %arg1[%c127] : memref<146xf32, #tpu.memory_space<smem>>
    %563 = vector.broadcast %562 : f32 to vector<2x9xf32>
    %564 = arith.addf %561, %563 : vector<2x9xf32>
    %c124 = arith.constant 124 : index
    %565 = memref.load %arg1[%c124] : memref<146xf32, #tpu.memory_space<smem>>
    %566 = vector.broadcast %565 : f32 to vector<2x9xf32>
    %567 = arith.mulf %566, %339 : vector<2x9xf32>
    %c128 = arith.constant 128 : index
    %568 = memref.load %arg1[%c128] : memref<146xf32, #tpu.memory_space<smem>>
    %569 = vector.broadcast %568 : f32 to vector<2x9xf32>
    %570 = arith.addf %567, %569 : vector<2x9xf32>
    %571 = arith.addf %438, %552 : vector<2x9xf32>
    %cst_25 = arith.constant 0.000000e+00 : f32
    %572 = vector.broadcast %cst_25 : f32 to vector<2x9xf32>
    %573 = arith.maximumf %571, %572 : vector<2x9xf32>
    %574 = arith.addf %474, %558 : vector<2x9xf32>
    %cst_26 = arith.constant 0.000000e+00 : f32
    %575 = vector.broadcast %cst_26 : f32 to vector<2x9xf32>
    %576 = arith.maximumf %574, %575 : vector<2x9xf32>
    %577 = arith.addf %510, %564 : vector<2x9xf32>
    %cst_27 = arith.constant 0.000000e+00 : f32
    %578 = vector.broadcast %cst_27 : f32 to vector<2x9xf32>
    %579 = arith.maximumf %577, %578 : vector<2x9xf32>
    %580 = arith.addf %546, %570 : vector<2x9xf32>
    %cst_28 = arith.constant 0.000000e+00 : f32
    %581 = vector.broadcast %cst_28 : f32 to vector<2x9xf32>
    %582 = arith.maximumf %580, %581 : vector<2x9xf32>
    %583 = vector.extract_strided_slice %573 {offsets = [0, 0], sizes = [2, 1], strides = [1, 1]} : vector<2x9xf32> to vector<2x1xf32>
    %584 = vector.shape_cast %583 : vector<2x1xf32> to vector<2x1xf32>
    %585 = vector.broadcast %584 : vector<2x1xf32> to vector<2x2xf32>
    %586 = vector.extract_strided_slice %573 {offsets = [0, 0], sizes = [2, 7], strides = [1, 1]} : vector<2x9xf32> to vector<2x7xf32>
    %587 = tpu.concatenate %585, %586 in 1 : vector<2x2xf32>, vector<2x7xf32> -> vector<2x9xf32>
    %588 = vector.extract_strided_slice %576 {offsets = [0, 0], sizes = [2, 1], strides = [1, 1]} : vector<2x9xf32> to vector<2x1xf32>
    %589 = vector.shape_cast %588 : vector<2x1xf32> to vector<2x1xf32>
    %590 = vector.broadcast %589 : vector<2x1xf32> to vector<2x2xf32>
    %591 = vector.extract_strided_slice %576 {offsets = [0, 0], sizes = [2, 7], strides = [1, 1]} : vector<2x9xf32> to vector<2x7xf32>
    %592 = tpu.concatenate %590, %591 in 1 : vector<2x2xf32>, vector<2x7xf32> -> vector<2x9xf32>
    %593 = vector.extract_strided_slice %579 {offsets = [0, 0], sizes = [2, 1], strides = [1, 1]} : vector<2x9xf32> to vector<2x1xf32>
    %594 = vector.shape_cast %593 : vector<2x1xf32> to vector<2x1xf32>
    %595 = vector.broadcast %594 : vector<2x1xf32> to vector<2x2xf32>
    %596 = vector.extract_strided_slice %579 {offsets = [0, 0], sizes = [2, 7], strides = [1, 1]} : vector<2x9xf32> to vector<2x7xf32>
    %597 = tpu.concatenate %595, %596 in 1 : vector<2x2xf32>, vector<2x7xf32> -> vector<2x9xf32>
    %598 = vector.extract_strided_slice %582 {offsets = [0, 0], sizes = [2, 1], strides = [1, 1]} : vector<2x9xf32> to vector<2x1xf32>
    %599 = vector.shape_cast %598 : vector<2x1xf32> to vector<2x1xf32>
    %600 = vector.broadcast %599 : vector<2x1xf32> to vector<2x2xf32>
    %601 = vector.extract_strided_slice %582 {offsets = [0, 0], sizes = [2, 7], strides = [1, 1]} : vector<2x9xf32> to vector<2x7xf32>
    %602 = tpu.concatenate %600, %601 in 1 : vector<2x2xf32>, vector<2x7xf32> -> vector<2x9xf32>
    %c129 = arith.constant 129 : index
    %603 = memref.load %arg1[%c129] : memref<146xf32, #tpu.memory_space<smem>>
    %604 = vector.broadcast %603 : f32 to vector<2x9xf32>
    %605 = arith.mulf %604, %587 : vector<2x9xf32>
    %c130 = arith.constant 130 : index
    %606 = memref.load %arg1[%c130] : memref<146xf32, #tpu.memory_space<smem>>
    %607 = vector.broadcast %606 : f32 to vector<2x9xf32>
    %608 = arith.mulf %607, %592 : vector<2x9xf32>
    %609 = arith.addf %605, %608 : vector<2x9xf32>
    %c131 = arith.constant 131 : index
    %610 = memref.load %arg1[%c131] : memref<146xf32, #tpu.memory_space<smem>>
    %611 = vector.broadcast %610 : f32 to vector<2x9xf32>
    %612 = arith.mulf %611, %597 : vector<2x9xf32>
    %613 = arith.addf %609, %612 : vector<2x9xf32>
    %c132 = arith.constant 132 : index
    %614 = memref.load %arg1[%c132] : memref<146xf32, #tpu.memory_space<smem>>
    %615 = vector.broadcast %614 : f32 to vector<2x9xf32>
    %616 = arith.mulf %615, %602 : vector<2x9xf32>
    %617 = arith.addf %613, %616 : vector<2x9xf32>
    %c133 = arith.constant 133 : index
    %618 = memref.load %arg1[%c133] : memref<146xf32, #tpu.memory_space<smem>>
    %619 = vector.broadcast %618 : f32 to vector<2x9xf32>
    %620 = arith.mulf %619, %573 : vector<2x9xf32>
    %621 = arith.addf %617, %620 : vector<2x9xf32>
    %c134 = arith.constant 134 : index
    %622 = memref.load %arg1[%c134] : memref<146xf32, #tpu.memory_space<smem>>
    %623 = vector.broadcast %622 : f32 to vector<2x9xf32>
    %624 = arith.mulf %623, %576 : vector<2x9xf32>
    %625 = arith.addf %621, %624 : vector<2x9xf32>
    %c135 = arith.constant 135 : index
    %626 = memref.load %arg1[%c135] : memref<146xf32, #tpu.memory_space<smem>>
    %627 = vector.broadcast %626 : f32 to vector<2x9xf32>
    %628 = arith.mulf %627, %579 : vector<2x9xf32>
    %629 = arith.addf %625, %628 : vector<2x9xf32>
    %c136 = arith.constant 136 : index
    %630 = memref.load %arg1[%c136] : memref<146xf32, #tpu.memory_space<smem>>
    %631 = vector.broadcast %630 : f32 to vector<2x9xf32>
    %632 = arith.mulf %631, %582 : vector<2x9xf32>
    %633 = arith.addf %629, %632 : vector<2x9xf32>
    %c137 = arith.constant 137 : index
    %634 = memref.load %arg1[%c137] : memref<146xf32, #tpu.memory_space<smem>>
    %635 = vector.broadcast %634 : f32 to vector<2x9xf32>
    %636 = arith.addf %633, %635 : vector<2x9xf32>
    %cst_29 = arith.constant 0.000000e+00 : f32
    %637 = vector.broadcast %cst_29 : f32 to vector<2x9xf32>
    %638 = arith.maximumf %636, %637 : vector<2x9xf32>
    %639 = vector.extract_strided_slice %638 {offsets = [0, 0], sizes = [2, 1], strides = [1, 1]} : vector<2x9xf32> to vector<2x1xf32>
    %640 = vector.shape_cast %639 : vector<2x1xf32> to vector<2x1xf32>
    %641 = vector.broadcast %640 : vector<2x1xf32> to vector<2x2xf32>
    %642 = vector.extract_strided_slice %638 {offsets = [0, 0], sizes = [2, 7], strides = [1, 1]} : vector<2x9xf32> to vector<2x7xf32>
    %643 = tpu.concatenate %641, %642 in 1 : vector<2x2xf32>, vector<2x7xf32> -> vector<2x9xf32>
    %c138 = arith.constant 138 : index
    %644 = memref.load %arg1[%c138] : memref<146xf32, #tpu.memory_space<smem>>
    %645 = vector.broadcast %644 : f32 to vector<2x9xf32>
    %646 = arith.mulf %645, %643 : vector<2x9xf32>
    %c139 = arith.constant 139 : index
    %647 = memref.load %arg1[%c139] : memref<146xf32, #tpu.memory_space<smem>>
    %648 = vector.broadcast %647 : f32 to vector<2x9xf32>
    %649 = arith.mulf %648, %638 : vector<2x9xf32>
    %650 = arith.addf %646, %649 : vector<2x9xf32>
    %c140 = arith.constant 140 : index
    %651 = memref.load %arg1[%c140] : memref<146xf32, #tpu.memory_space<smem>>
    %652 = vector.broadcast %651 : f32 to vector<2x9xf32>
    %653 = arith.addf %650, %652 : vector<2x9xf32>
    %cst_30 = arith.constant 0.000000e+00 : f32
    %654 = vector.broadcast %cst_30 : f32 to vector<2x9xf32>
    %655 = arith.maximumf %653, %654 : vector<2x9xf32>
    %c141 = arith.constant 141 : index
    %656 = memref.load %arg1[%c141] : memref<146xf32, #tpu.memory_space<smem>>
    %657 = vector.broadcast %656 : f32 to vector<2x9xf32>
    %658 = arith.mulf %657, %573 : vector<2x9xf32>
    %c142 = arith.constant 142 : index
    %659 = memref.load %arg1[%c142] : memref<146xf32, #tpu.memory_space<smem>>
    %660 = vector.broadcast %659 : f32 to vector<2x9xf32>
    %661 = arith.mulf %660, %576 : vector<2x9xf32>
    %662 = arith.addf %658, %661 : vector<2x9xf32>
    %c143 = arith.constant 143 : index
    %663 = memref.load %arg1[%c143] : memref<146xf32, #tpu.memory_space<smem>>
    %664 = vector.broadcast %663 : f32 to vector<2x9xf32>
    %665 = arith.mulf %664, %579 : vector<2x9xf32>
    %666 = arith.addf %662, %665 : vector<2x9xf32>
    %c144 = arith.constant 144 : index
    %667 = memref.load %arg1[%c144] : memref<146xf32, #tpu.memory_space<smem>>
    %668 = vector.broadcast %667 : f32 to vector<2x9xf32>
    %669 = arith.mulf %668, %582 : vector<2x9xf32>
    %670 = arith.addf %666, %669 : vector<2x9xf32>
    %c145 = arith.constant 145 : index
    %671 = memref.load %arg1[%c145] : memref<146xf32, #tpu.memory_space<smem>>
    %672 = vector.broadcast %671 : f32 to vector<2x9xf32>
    %673 = arith.addf %670, %672 : vector<2x9xf32>
    %674 = arith.addf %655, %673 : vector<2x9xf32>
    %cst_31 = arith.constant 0.000000e+00 : f32
    %675 = vector.broadcast %cst_31 : f32 to vector<2x9xf32>
    %676 = arith.maximumf %674, %675 : vector<2x9xf32>
    %677 = arith.addf %676, %339 : vector<2x9xf32>
    %c0_32 = arith.constant 0 : index
    %c0_33 = arith.constant 0 : index
    %678 = vector.load %arg2[%c0_32, %c0_33] : memref<288x384xf32, #tpu.memory_space<vmem>>, vector<1x384xf32>
    %c1_34 = arith.constant 1 : index
    %c0_35 = arith.constant 0 : index
    %679 = vector.load %arg2[%c1_34, %c0_35] : memref<288x384xf32, #tpu.memory_space<vmem>>, vector<1x128xf32>
    %c2_36 = arith.constant 2 : index
    %c0_37 = arith.constant 0 : index
    %680 = vector.load %arg2[%c2_36, %c0_37] : memref<288x384xf32, #tpu.memory_space<vmem>>, vector<1x128xf32>
    %c8_38 = arith.constant 8 : index
    %c0_39 = arith.constant 0 : index
    %681 = vector.load %arg2[%c8_38, %c0_39] : memref<288x384xf32, #tpu.memory_space<vmem>>, vector<2x128xf32>
    %c16_40 = arith.constant 16 : index
    %c0_41 = arith.constant 0 : index
    %682 = vector.load %arg2[%c16_40, %c0_41] : memref<288x384xf32, #tpu.memory_space<vmem>>, vector<9x384xf32>
    %c32_42 = arith.constant 32 : index
    %c0_43 = arith.constant 0 : index
    %683 = vector.load %arg2[%c32_42, %c0_43] : memref<288x384xf32, #tpu.memory_space<vmem>>, vector<128x384xf32>
    %c160 = arith.constant 160 : index
    %c0_44 = arith.constant 0 : index
    %684 = vector.load %arg2[%c160, %c0_44] : memref<288x384xf32, #tpu.memory_space<vmem>>, vector<128x128xf32>
    %cst_45 = arith.constant 0.000000e+00 : f32
    %685 = vector.broadcast %cst_45 : f32 to vector<8x128xf32>
    %c0_46 = arith.constant 0 : index
    %c0_47 = arith.constant 0 : index
    %686 = vector.load %arg4[%c0_46, %c0_47] : memref<8x128xf32, #tpu.memory_space<vmem>>, vector<8x128xf32>
    tpu.vector_store %arg4[%c0_46, %c0_47], %685 {strides = array<i32>} : memref<8x128xf32, #tpu.memory_space<vmem>>, vector<8x128xf32>,
    %cst_48 = arith.constant dense<0.000000e+00> : vector<2x384xf32>
    %687 = tpu.matmul %677, %682, %cst_48 {dimension_numbers = #tpu.dot_dimension_numbers<[1], [0], [0], [1], [0, 0, 1, 1], [], []>} : vector<2x9xf32>, vector<9x384xf32>, vector<2x384xf32> -> vector<2x384xf32>
    %688 = vector.broadcast %678 : vector<1x384xf32> to vector<2x384xf32>
    %689 = arith.addf %687, %688 : vector<2x384xf32>
    %cst_49 = arith.constant dense<0.000000e+00> : vector<2x384xf32>
    %690 = tpu.matmul %681, %683, %cst_49 {dimension_numbers = #tpu.dot_dimension_numbers<[1], [0], [0], [1], [0, 0, 1, 1], [], []>} : vector<2x128xf32>, vector<128x384xf32>, vector<2x384xf32> -> vector<2x384xf32>
    %691 = vector.extract_strided_slice %689 {offsets = [0, 0], sizes = [2, 128], strides = [1, 1]} : vector<2x384xf32> to vector<2x128xf32>
    %692 = vector.extract_strided_slice %690 {offsets = [0, 0], sizes = [2, 128], strides = [1, 1]} : vector<2x384xf32> to vector<2x128xf32>
    %693 = arith.addf %691, %692 : vector<2x128xf32>
    %694 = arith.negf %693 : vector<2x128xf32>
    %695 = math.exp %694 : vector<2x128xf32>
    %cst_50 = arith.constant 1.000000e+00 : f32
    %696 = vector.broadcast %cst_50 : f32 to vector<2x128xf32>
    %697 = arith.addf %696, %695 : vector<2x128xf32>
    %698 = arith.divf %696, %697 : vector<2x128xf32>
    %699 = vector.extract_strided_slice %689 {offsets = [0, 128], sizes = [2, 128], strides = [1, 1]} : vector<2x384xf32> to vector<2x128xf32>
    %700 = vector.extract_strided_slice %690 {offsets = [0, 128], sizes = [2, 128], strides = [1, 1]} : vector<2x384xf32> to vector<2x128xf32>
    %701 = arith.addf %699, %700 : vector<2x128xf32>
    %702 = arith.negf %701 : vector<2x128xf32>
    %703 = math.exp %702 : vector<2x128xf32>
    %cst_51 = arith.constant 1.000000e+00 : f32
    %704 = vector.broadcast %cst_51 : f32 to vector<2x128xf32>
    %705 = arith.addf %704, %703 : vector<2x128xf32>
    %706 = arith.divf %704, %705 : vector<2x128xf32>
    %707 = vector.extract_strided_slice %689 {offsets = [0, 256], sizes = [2, 128], strides = [1, 1]} : vector<2x384xf32> to vector<2x128xf32>
    %708 = vector.extract_strided_slice %690 {offsets = [0, 256], sizes = [2, 128], strides = [1, 1]} : vector<2x384xf32> to vector<2x128xf32>
    %709 = vector.broadcast %679 : vector<1x128xf32> to vector<2x128xf32>
    %710 = arith.addf %708, %709 : vector<2x128xf32>
    %711 = arith.mulf %698, %710 : vector<2x128xf32>
    %712 = arith.addf %707, %711 : vector<2x128xf32>
    %713 = math.tanh %712 : vector<2x128xf32>
    %cst_52 = arith.constant 1.000000e+00 : f32
    %714 = vector.broadcast %cst_52 : f32 to vector<2x128xf32>
    %715 = arith.subf %714, %706 : vector<2x128xf32>
    %716 = arith.mulf %715, %713 : vector<2x128xf32>
    %717 = arith.mulf %706, %681 : vector<2x128xf32>
    %718 = arith.addf %716, %717 : vector<2x128xf32>
    %c0_53 = arith.constant 0 : index
    %c0_54 = arith.constant 0 : index
    %719 = vector.load %arg4[%c0_53, %c0_54] : memref<8x128xf32, #tpu.memory_space<vmem>>, vector<2x128xf32>
    tpu.vector_store %arg4[%c0_53, %c0_54], %718 {strides = array<i32>} : memref<8x128xf32, #tpu.memory_space<vmem>>, vector<2x128xf32>,
    %c0_55 = arith.constant 0 : index
    %c0_56 = arith.constant 0 : index
    %720 = vector.load %arg4[%c0_55, %c0_56] : memref<8x128xf32, #tpu.memory_space<vmem>>, vector<8x128xf32>
    %cst_57 = arith.constant dense<0.000000e+00> : vector<8x128xf32>
    %721 = tpu.matmul %720, %684, %cst_57 {dimension_numbers = #tpu.dot_dimension_numbers<[1], [0], [0], [1], [0, 0, 1, 1], [], []>} : vector<8x128xf32>, vector<128x128xf32>, vector<8x128xf32> -> vector<8x128xf32>
    %722 = vector.broadcast %680 : vector<1x128xf32> to vector<8x128xf32>
    %723 = arith.addf %721, %722 : vector<8x128xf32>
    %c0_58 = arith.constant 0 : index
    %c0_59 = arith.constant 0 : index
    %724 = vector.load %arg3[%c0_58, %c0_59] : memref<8x128xf32, #tpu.memory_space<vmem>>, vector<8x128xf32>
    tpu.vector_store %arg3[%c0_58, %c0_59], %723 {strides = array<i32>} : memref<8x128xf32, #tpu.memory_space<vmem>>, vector<8x128xf32>,
    return
  }
}

</mosaic_0001>

<llo_original>
// kernel: tpu_custom_call.1
$region0: #{tpu_custom_call.1}
  #allocation0 [shape = 'u32[]', space=smem, size = 0x4, offset = 0x4, fixed_abs, tag = 'smem constant byte address 0x4 - core index']
  #allocation1 [shape = 'u32[144,128]{1,0:T(1,128)}', space=vmem, size = 0x12000, scoped, tag = 'internal scratch']
  #allocation2 [shape = 'f32[8,128]{1,0:T(8,128)}', space=vmem, size = 0x1000, scoped, tag = 'scratch operand']
  %s0 = inlined_call_operand.hbm [shape: f32[1,2,9], index: 0, kind: input, shape index: {}]
  %s1 = inlined_call_operand.hbm [shape: f32[146], index: 1, kind: input, shape index: {}]
  %s2 = inlined_call_operand.hbm [shape: f32[288,384], index: 2, kind: input, shape index: {}]
  %s3 = inlined_call_operand.hbm [shape: f32[8,128], index: 3, kind: output, shape index: {}]
  %s4 = sld [smem:[#allocation0]]
  $region34: #{tpu_custom_call.1} parent=0
    _
  %s6 = ssub.s32 1, %s4
  %s7 = scalar_select 0, %s6, %s4
  $region1: #{tpu_custom_call.1} parent=0
    #allocation3 [shape = 'u8[1024]{0}', space=vmem, size = 0x400, scoped, tag = 'input window, operand 0, single buffered']
    #allocation4 [shape = 's32[1]{0}', space=sflag, size = 0x4, scoped, tag = 'scoped memory for tpu_custom_call.1']
    #allocation5 [shape = 's32[1]{0}', space=sflag, size = 0x4, scoped, tag = 'scoped memory for tpu_custom_call.1']
    #allocation6 [shape = 's32[1]{0}', space=sflag, size = 0x4, scoped, tag = 'scoped memory for tpu_custom_call.1']
    #allocation7 [shape = 'u8[1024]{0}', space=smem, size = 0x400, scoped, tag = 'input window, operand 1, single buffered']
    #allocation8 [shape = 'u8[442368]{0}', space=vmem, size = 0x6c000, scoped, tag = 'input window, operand 2, single buffered']
    #allocation9 [shape = 's32[1]{0}', space=sflag, size = 0x4, scoped, tag = 'scoped memory for tpu_custom_call.1']
    #allocation10 [shape = 'u8[4096]{0}', space=vmem, size = 0x1000, scoped, tag = 'output window, operand 0, single buffered']
    %8 = vsyncpa [#allocation4], 0
    %9 = vsyncpa [#allocation6], 0
    %10 = vsyncpa [#allocation9], 0
    %11 = vsyncpa [#allocation5], 0
    // Predicated region
    $region2: #{tpu_custom_call.1} parent=1 // pred_check
      _
    $region3: #{tpu_custom_call.1} parent=1 // pred_check_branch
      %13 = sbr.rel (0) target = $region5
    $region4: #{tpu_custom_call.1} parent=1 // pred_region
      %s15 = ssub.s32 32, 32
      %16 = vsyncadd [#allocation4], %s15
      %s18 = sshll.u32 [#allocation3], 4
      %s19 = int_to_ptr.vmem [resolvable:$true] %s18
      %21 = dma.hbm_to_vmem [thread:$0]  %s0, 32, %s19, [#allocation4]
    $region5: #{tpu_custom_call.1} parent=1 // pred_fallthru
      _
    // Predicated region
    $region6: #{tpu_custom_call.1} parent=1 // pred_check
      _
    $region7: #{tpu_custom_call.1} parent=1 // pred_check_branch
      %23 = sbr.rel (0) target = $region9
    $region8: #{tpu_custom_call.1} parent=1 // pred_region
      %s25 = ssub.s32 32, 32
      %26 = vsyncadd [#allocation6], %s25
      %29 = dma.hbm_to_smem %s1, 32, [#allocation7], [#allocation6]
    $region9: #{tpu_custom_call.1} parent=1 // pred_fallthru
      _
    // Predicated region
    $region10: #{tpu_custom_call.1} parent=1 // pred_check
      _
    $region11: #{tpu_custom_call.1} parent=1 // pred_check_branch
      %31 = sbr.rel (0) target = $region13
    $region12: #{tpu_custom_call.1} parent=1 // pred_region
      %s33 = ssub.s32 13824, 13824
      %34 = vsyncadd [#allocation9], %s33
      %s35 = sshll.u32 [#allocation8], 4
      %s36 = int_to_ptr.vmem [resolvable:$true] %s35
      %41 = dma.hbm_to_vmem [thread:$0]  %s2, 13824, %s36, [#allocation9], 384, 384, 24
    $region13: #{tpu_custom_call.1} parent=1 // pred_fallthru
      _
    // Predicated region
    $region14: #{tpu_custom_call.1} parent=1 // pred_check
      _
    $region15: #{tpu_custom_call.1} parent=1 // pred_check_branch
      %43 = sbr.rel (0) target = $region17
    $region16: #{tpu_custom_call.1} parent=1 // pred_region
      %44 = dma.done [#allocation4], 32
    $region17: #{tpu_custom_call.1} parent=1 // pred_fallthru
      _
    // Predicated region
    $region18: #{tpu_custom_call.1} parent=1 // pred_check
      _
    $region19: #{tpu_custom_call.1} parent=1 // pred_check_branch
      %46 = sbr.rel (0) target = $region21
    $region20: #{tpu_custom_call.1} parent=1 // pred_region
      %47 = dma.done [#allocation6], 32
    $region21: #{tpu_custom_call.1} parent=1 // pred_fallthru
      _
    // Predicated region
    $region22: #{tpu_custom_call.1} parent=1 // pred_check
      _
    $region23: #{tpu_custom_call.1} parent=1 // pred_check_branch
      %49 = sbr.rel (0) target = $region25
    $region24: #{tpu_custom_call.1} parent=1 // pred_region
      %50 = dma.done [#allocation9], 13824
    $region25: #{tpu_custom_call.1} parent=1 // pred_fallthru
      _
    %51 = sfence
    %v52 = vld [vmem:[#allocation3] sm:$0x3]
    %54 = vrot.lane.b32.xlu0 %v52, 1
    %v55 = vpop.permute.xlu0 %54
    %vm57 = vcmask 7168
    %v58 = vsel %vm57, %v52, %v55
    %s59 = sld [smem:[#allocation7]]
    %v60 = vstv %s59
    %v61 = vmul.f32 %v60, %v58
    %s62 = sld [smem:[#allocation7 + $0x1]]
    %v63 = vstv %s62
    %v64 = vmul.f32 %v63, %v52
    %v65 = vadd.f32 %v61, %v64
    %s66 = sld [smem:[#allocation7 + $0x8]]
    %v67 = vstv %s66
    %v68 = vadd.f32 %v65, %v67
    %v69 = vmax.f32 %v68, 0.0
    %s70 = sld [smem:[#allocation7 + $0x2]]
    %v71 = vstv %s70
    %v72 = vmul.f32 %v71, %v58
    %s73 = sld [smem:[#allocation7 + $0x3]]
    %v74 = vstv %s73
    %v75 = vmul.f32 %v74, %v52
    %v76 = vadd.f32 %v72, %v75
    %s77 = sld [smem:[#allocation7 + $0x9]]
    %v78 = vstv %s77
    %v79 = vadd.f32 %v76, %v78
    %v80 = vmax.f32 %v79, 0.0
    %s81 = sld [smem:[#allocation7 + $0x4]]
    %v82 = vstv %s81
    %v83 = vmul.f32 %v82, %v58
    %s84 = sld [smem:[#allocation7 + $0x5]]
    %v85 = vstv %s84
    %v86 = vmul.f32 %v85, %v52
    %v87 = vadd.f32 %v83, %v86
    %s88 = sld [smem:[#allocation7 + $0xa]]
    %v89 = vstv %s88
    %v90 = vadd.f32 %v87, %v89
    %v91 = vmax.f32 %v90, 0.0
    %s92 = sld [smem:[#allocation7 + $0x6]]
    %v93 = vstv %s92
    %v94 = vmul.f32 %v93, %v58
    %s95 = sld [smem:[#allocation7 + $0x7]]
    %v96 = vstv %s95
    %v97 = vmul.f32 %v96, %v52
    %v98 = vadd.f32 %v94, %v97
    %s99 = sld [smem:[#allocation7 + $0xb]]
    %v100 = vstv %s99
    %v101 = vadd.f32 %v98, %v100
    %v102 = vmax.f32 %v101, 0.0
    %104 = vrot.lane.b32.xlu0 %v69, 1
    %v105 = vpop.permute.xlu0 %104
    %v107 = vsel %vm57, %v69, %v105
    %109 = vrot.lane.b32.xlu0 %v80, 1
    %v110 = vpop.permute.xlu0 %109
    %v112 = vsel %vm57, %v80, %v110
    %114 = vrot.lane.b32.xlu0 %v91, 1
    %v115 = vpop.permute.xlu0 %114
    %v117 = vsel %vm57, %v91, %v115
    %119 = vrot.lane.b32.xlu0 %v102, 1
    %v120 = vpop.permute.xlu0 %119
    %v122 = vsel %vm57, %v102, %v120
    %s123 = sld [smem:[#allocation7 + $0xc]]
    %v124 = vstv %s123
    %v125 = vmul.f32 %v124, %v107
    %s126 = sld [smem:[#allocation7 + $0xd]]
    %v127 = vstv %s126
    %v128 = vmul.f32 %v127, %v112
    %v129 = vadd.f32 %v125, %v128
    %s130 = sld [smem:[#allocation7 + $0xe]]
    %v131 = vstv %s130
    %v132 = vmul.f32 %v131, %v117
    %v133 = vadd.f32 %v129, %v132
    %s134 = sld [smem:[#allocation7 + $0xf]]
    %v135 = vstv %s134
    %v136 = vmul.f32 %v135, %v122
    %v137 = vadd.f32 %v133, %v136
    %s138 = sld [smem:[#allocation7 + $0x10]]
    %v139 = vstv %s138
    %v140 = vmul.f32 %v139, %v69
    %v141 = vadd.f32 %v137, %v140
    %s142 = sld [smem:[#allocation7 + $0x11]]
    %v143 = vstv %s142
    %v144 = vmul.f32 %v143, %v80
    %v145 = vadd.f32 %v141, %v144
    %s146 = sld [smem:[#allocation7 + $0x12]]
    %v147 = vstv %s146
    %v148 = vmul.f32 %v147, %v91
    %v149 = vadd.f32 %v145, %v148
    %s150 = sld [smem:[#allocation7 + $0x13]]
    %v151 = vstv %s150
    %v152 = vmul.f32 %v151, %v102
    %v153 = vadd.f32 %v149, %v152
    %s154 = sld [smem:[#allocation7 + $0x2c]]
    %v155 = vstv %s154
    %v156 = vadd.f32 %v153, %v155
    %v157 = vmax.f32 %v156, 0.0
    %s158 = sld [smem:[#allocation7 + $0x14]]
    %v159 = vstv %s158
    %v160 = vmul.f32 %v159, %v107
    %s161 = sld [smem:[#allocation7 + $0x15]]
    %v162 = vstv %s161
    %v163 = vmul.f32 %v162, %v112
    %v164 = vadd.f32 %v160, %v163
    %s165 = sld [smem:[#allocation7 + $0x16]]
    %v166 = vstv %s165
    %v167 = vmul.f32 %v166, %v117
    %v168 = vadd.f32 %v164, %v167
    %s169 = sld [smem:[#allocation7 + $0x17]]
    %v170 = vstv %s169
    %v171 = vmul.f32 %v170, %v122
    %v172 = vadd.f32 %v168, %v171
    %s173 = sld [smem:[#allocation7 + $0x18]]
    %v174 = vstv %s173
    %v175 = vmul.f32 %v174, %v69
    %v176 = vadd.f32 %v172, %v175
    %s177 = sld [smem:[#allocation7 + $0x19]]
    %v178 = vstv %s177
    %v179 = vmul.f32 %v178, %v80
    %v180 = vadd.f32 %v176, %v179
    %s181 = sld [smem:[#allocation7 + $0x1a]]
    %v182 = vstv %s181
    %v183 = vmul.f32 %v182, %v91
    %v184 = vadd.f32 %v180, %v183
    %s185 = sld [smem:[#allocation7 + $0x1b]]
    %v186 = vstv %s185
    %v187 = vmul.f32 %v186, %v102
    %v188 = vadd.f32 %v184, %v187
    %s189 = sld [smem:[#allocation7 + $0x2d]]
    %v190 = vstv %s189
    %v191 = vadd.f32 %v188, %v190
    %v192 = vmax.f32 %v191, 0.0
    %s193 = sld [smem:[#allocation7 + $0x1c]]
    %v194 = vstv %s193
    %v195 = vmul.f32 %v194, %v107
    %s196 = sld [smem:[#allocation7 + $0x1d]]
    %v197 = vstv %s196
    %v198 = vmul.f32 %v197, %v112
    %v199 = vadd.f32 %v195, %v198
    %s200 = sld [smem:[#allocation7 + $0x1e]]
    %v201 = vstv %s200
    %v202 = vmul.f32 %v201, %v117
    %v203 = vadd.f32 %v199, %v202
    %s204 = sld [smem:[#allocation7 + $0x1f]]
    %v205 = vstv %s204
    %v206 = vmul.f32 %v205, %v122
    %v207 = vadd.f32 %v203, %v206
    %s208 = sld [smem:[#allocation7 + $0x20]]
    %v209 = vstv %s208
    %v210 = vmul.f32 %v209, %v69
    %v211 = vadd.f32 %v207, %v210
    %s212 = sld [smem:[#allocation7 + $0x21]]
    %v213 = vstv %s212
    %v214 = vmul.f32 %v213, %v80
    %v215 = vadd.f32 %v211, %v214
    %s216 = sld [smem:[#allocation7 + $0x22]]
    %v217 = vstv %s216
    %v218 = vmul.f32 %v217, %v91
    %v219 = vadd.f32 %v215, %v218
    %s220 = sld [smem:[#allocation7 + $0x23]]
    %v221 = vstv %s220
    %v222 = vmul.f32 %v221, %v102
    %v223 = vadd.f32 %v219, %v222
    %s224 = sld [smem:[#allocation7 + $0x2e]]
    %v225 = vstv %s224
    %v226 = vadd.f32 %v223, %v225
    %v227 = vmax.f32 %v226, 0.0
    %s228 = sld [smem:[#allocation7 + $0x24]]
    %v229 = vstv %s228
    %v230 = vmul.f32 %v229, %v107
    %s231 = sld [smem:[#allocation7 + $0x25]]
    %v232 = vstv %s231
    %v233 = vmul.f32 %v232, %v112
    %v234 = vadd.f32 %v230, %v233
    %s235 = sld [smem:[#allocation7 + $0x26]]
    %v236 = vstv %s235
    %v237 = vmul.f32 %v236, %v117
    %v238 = vadd.f32 %v234, %v237
    %s239 = sld [smem:[#allocation7 + $0x27]]
    %v240 = vstv %s239
    %v241 = vmul.f32 %v240, %v122
    %v242 = vadd.f32 %v238, %v241
    %s243 = sld [smem:[#allocation7 + $0x28]]
    %v244 = vstv %s243
    %v245 = vmul.f32 %v244, %v69
    %v246 = vadd.f32 %v242, %v245
    %s247 = sld [smem:[#allocation7 + $0x29]]
    %v248 = vstv %s247
    %v249 = vmul.f32 %v248, %v80
    %v250 = vadd.f32 %v246, %v249
    %s251 = sld [smem:[#allocation7 + $0x2a]]
    %v252 = vstv %s251
    %v253 = vmul.f32 %v252, %v91
    %v254 = vadd.f32 %v250, %v253
    %s255 = sld [smem:[#allocation7 + $0x2b]]
    %v256 = vstv %s255
    %v257 = vmul.f32 %v256, %v102
    %v258 = vadd.f32 %v254, %v257
    %s259 = sld [smem:[#allocation7 + $0x2f]]
    %v260 = vstv %s259
    %v261 = vadd.f32 %v258, %v260
    %v262 = vmax.f32 %v261, 0.0
    %s263 = sld [smem:[#allocation7 + $0x30]]
    %v264 = vstv %s263
    %v265 = vmul.f32 %v264, %v52
    %s266 = sld [smem:[#allocation7 + $0x34]]
    %v267 = vstv %s266
    %v268 = vadd.f32 %v265, %v267
    %s269 = sld [smem:[#allocation7 + $0x31]]
    %v270 = vstv %s269
    %v271 = vmul.f32 %v270, %v52
    %s272 = sld [smem:[#allocation7 + $0x35]]
    %v273 = vstv %s272
    %v274 = vadd.f32 %v271, %v273
    %s275 = sld [smem:[#allocation7 + $0x32]]
    %v276 = vstv %s275
    %v277 = vmul.f32 %v276, %v52
    %s278 = sld [smem:[#allocation7 + $0x36]]
    %v279 = vstv %s278
    %v280 = vadd.f32 %v277, %v279
    %s281 = sld [smem:[#allocation7 + $0x33]]
    %v282 = vstv %s281
    %v283 = vmul.f32 %v282, %v52
    %s284 = sld [smem:[#allocation7 + $0x37]]
    %v285 = vstv %s284
    %v286 = vadd.f32 %v283, %v285
    %v287 = vadd.f32 %v157, %v268
    %v288 = vmax.f32 %v287, 0.0
    %v289 = vadd.f32 %v192, %v274
    %v290 = vmax.f32 %v289, 0.0
    %v291 = vadd.f32 %v227, %v280
    %v292 = vmax.f32 %v291, 0.0
    %v293 = vadd.f32 %v262, %v286
    %v294 = vmax.f32 %v293, 0.0
    %296 = vset.pattern.permute.xlu0 0
    %297 = vperm.xlu0 %296, %v288
    %v298 = vpop.permute.xlu0 %297
    %300 = vrot.lane.b32.xlu0 %v288, 2
    %v301 = vpop.permute.xlu0 %300
    %vm303 = vcmask 15360
    %v304 = vsel %vm303, %v298, %v301
    %306 = vset.pattern.permute.xlu0 0
    %307 = vperm.xlu0 %306, %v290
    %v308 = vpop.permute.xlu0 %307
    %310 = vrot.lane.b32.xlu0 %v290, 2
    %v311 = vpop.permute.xlu0 %310
    %v313 = vsel %vm303, %v308, %v311
    %315 = vset.pattern.permute.xlu0 0
    %316 = vperm.xlu0 %315, %v292
    %v317 = vpop.permute.xlu0 %316
    %319 = vrot.lane.b32.xlu0 %v292, 2
    %v320 = vpop.permute.xlu0 %319
    %v322 = vsel %vm303, %v317, %v320
    %324 = vset.pattern.permute.xlu0 0
    %325 = vperm.xlu0 %324, %v294
    %v326 = vpop.permute.xlu0 %325
    %328 = vrot.lane.b32.xlu0 %v294, 2
    %v329 = vpop.permute.xlu0 %328
    %v331 = vsel %vm303, %v326, %v329
    %s332 = sld [smem:[#allocation7 + $0x38]]
    %v333 = vstv %s332
    %v334 = vmul.f32 %v333, %v304
    %s335 = sld [smem:[#allocation7 + $0x39]]
    %v336 = vstv %s335
    %v337 = vmul.f32 %v336, %v313
    %v338 = vadd.f32 %v334, %v337
    %s339 = sld [smem:[#allocation7 + $0x3a]]
    %v340 = vstv %s339
    %v341 = vmul.f32 %v340, %v322
    %v342 = vadd.f32 %v338, %v341
    %s343 = sld [smem:[#allocation7 + $0x3b]]
    %v344 = vstv %s343
    %v345 = vmul.f32 %v344, %v331
    %v346 = vadd.f32 %v342, %v345
    %s347 = sld [smem:[#allocation7 + $0x3c]]
    %v348 = vstv %s347
    %v349 = vmul.f32 %v348, %v288
    %v350 = vadd.f32 %v346, %v349
    %s351 = sld [smem:[#allocation7 + $0x3d]]
    %v352 = vstv %s351
    %v353 = vmul.f32 %v352, %v290
    %v354 = vadd.f32 %v350, %v353
    %s355 = sld [smem:[#allocation7 + $0x3e]]
    %v356 = vstv %s355
    %v357 = vmul.f32 %v356, %v292
    %v358 = vadd.f32 %v354, %v357
    %s359 = sld [smem:[#allocation7 + $0x3f]]
    %v360 = vstv %s359
    %v361 = vmul.f32 %v360, %v294
    %v362 = vadd.f32 %v358, %v361
    %s363 = sld [smem:[#allocation7 + $0x40]]
    %v364 = vstv %s363
    %v365 = vadd.f32 %v362, %v364
    %v366 = vmax.f32 %v365, 0.0
    %368 = vset.pattern.permute.xlu0 0
    %369 = vperm.xlu0 %368, %v366
    %v370 = vpop.permute.xlu0 %369
    %372 = vrot.lane.b32.xlu0 %v366, 2
    %v373 = vpop.permute.xlu0 %372
    %v375 = vsel %vm303, %v370, %v373
    %s376 = sld [smem:[#allocation7 + $0x41]]
    %v377 = vstv %s376
    %v378 = vmul.f32 %v377, %v375
    %s379 = sld [smem:[#allocation7 + $0x42]]
    %v380 = vstv %s379
    %v381 = vmul.f32 %v380, %v366
    %v382 = vadd.f32 %v378, %v381
    %s383 = sld [smem:[#allocation7 + $0x43]]
    %v384 = vstv %s383
    %v385 = vadd.f32 %v382, %v384
    %v386 = vmax.f32 %v385, 0.0
    %s387 = sld [smem:[#allocation7 + $0x44]]
    %v388 = vstv %s387
    %v389 = vmul.f32 %v388, %v288
    %s390 = sld [smem:[#allocation7 + $0x45]]
    %v391 = vstv %s390
    %v392 = vmul.f32 %v391, %v290
    %v393 = vadd.f32 %v389, %v392
    %s394 = sld [smem:[#allocation7 + $0x46]]
    %v395 = vstv %s394
    %v396 = vmul.f32 %v395, %v292
    %v397 = vadd.f32 %v393, %v396
    %s398 = sld [smem:[#allocation7 + $0x47]]
    %v399 = vstv %s398
    %v400 = vmul.f32 %v399, %v294
    %v401 = vadd.f32 %v397, %v400
    %s402 = sld [smem:[#allocation7 + $0x48]]
    %v403 = vstv %s402
    %v404 = vadd.f32 %v401, %v403
    %v405 = vadd.f32 %v386, %v404
    %v406 = vmax.f32 %v405, 0.0
    %v407 = vadd.f32 %v406, %v52
    %409 = vrot.lane.b32.xlu0 %v407, 1
    %v410 = vpop.permute.xlu0 %409
    %v412 = vsel %vm57, %v407, %v410
    %s413 = sld [smem:[#allocation7 + $0x49]]
    %v414 = vstv %s413
    %v415 = vmul.f32 %v414, %v412
    %s416 = sld [smem:[#allocation7 + $0x4a]]
    %v417 = vstv %s416
    %v418 = vmul.f32 %v417, %v407
    %v419 = vadd.f32 %v415, %v418
    %s420 = sld [smem:[#allocation7 + $0x51]]
    %v421 = vstv %s420
    %v422 = vadd.f32 %v419, %v421
    %v423 = vmax.f32 %v422, 0.0
    %s424 = sld [smem:[#allocation7 + $0x4b]]
    %v425 = vstv %s424
    %v426 = vmul.f32 %v425, %v412
    %s427 = sld [smem:[#allocation7 + $0x4c]]
    %v428 = vstv %s427
    %v429 = vmul.f32 %v428, %v407
    %v430 = vadd.f32 %v426, %v429
    %s431 = sld [smem:[#allocation7 + $0x52]]
    %v432 = vstv %s431
    %v433 = vadd.f32 %v430, %v432
    %v434 = vmax.f32 %v433, 0.0
    %s435 = sld [smem:[#allocation7 + $0x4d]]
    %v436 = vstv %s435
    %v437 = vmul.f32 %v436, %v412
    %s438 = sld [smem:[#allocation7 + $0x4e]]
    %v439 = vstv %s438
    %v440 = vmul.f32 %v439, %v407
    %v441 = vadd.f32 %v437, %v440
    %s442 = sld [smem:[#allocation7 + $0x53]]
    %v443 = vstv %s442
    %v444 = vadd.f32 %v441, %v443
    %v445 = vmax.f32 %v444, 0.0
    %s446 = sld [smem:[#allocation7 + $0x4f]]
    %v447 = vstv %s446
    %v448 = vmul.f32 %v447, %v412
    %s449 = sld [smem:[#allocation7 + $0x50]]
    %v450 = vstv %s449
    %v451 = vmul.f32 %v450, %v407
    %v452 = vadd.f32 %v448, %v451
    %s453 = sld [smem:[#allocation7 + $0x54]]
    %v454 = vstv %s453
    %v455 = vadd.f32 %v452, %v454
    %v456 = vmax.f32 %v455, 0.0
    %458 = vrot.lane.b32.xlu0 %v423, 1
    %v459 = vpop.permute.xlu0 %458
    %v461 = vsel %vm57, %v423, %v459
    %463 = vrot.lane.b32.xlu0 %v434, 1
    %v464 = vpop.permute.xlu0 %463
    %v466 = vsel %vm57, %v434, %v464
    %468 = vrot.lane.b32.xlu0 %v445, 1
    %v469 = vpop.permute.xlu0 %468
    %v471 = vsel %vm57, %v445, %v469
    %473 = vrot.lane.b32.xlu0 %v456, 1
    %v474 = vpop.permute.xlu0 %473
    %v476 = vsel %vm57, %v456, %v474
    %s477 = sld [smem:[#allocation7 + $0x55]]
    %v478 = vstv %s477
    %v479 = vmul.f32 %v478, %v461
    %s480 = sld [smem:[#allocation7 + $0x56]]
    %v481 = vstv %s480
    %v482 = vmul.f32 %v481, %v466
    %v483 = vadd.f32 %v479, %v482
    %s484 = sld [smem:[#allocation7 + $0x57]]
    %v485 = vstv %s484
    %v486 = vmul.f32 %v485, %v471
    %v487 = vadd.f32 %v483, %v486
    %s488 = sld [smem:[#allocation7 + $0x58]]
    %v489 = vstv %s488
    %v490 = vmul.f32 %v489, %v476
    %v491 = vadd.f32 %v487, %v490
    %s492 = sld [smem:[#allocation7 + $0x59]]
    %v493 = vstv %s492
    %v494 = vmul.f32 %v493, %v423
    %v495 = vadd.f32 %v491, %v494
    %s496 = sld [smem:[#allocation7 + $0x5a]]
    %v497 = vstv %s496
    %v498 = vmul.f32 %v497, %v434
    %v499 = vadd.f32 %v495, %v498
    %s500 = sld [smem:[#allocation7 + $0x5b]]
    %v501 = vstv %s500
    %v502 = vmul.f32 %v501, %v445
    %v503 = vadd.f32 %v499, %v502
    %s504 = sld [smem:[#allocation7 + $0x5c]]
    %v505 = vstv %s504
    %v506 = vmul.f32 %v505, %v456
    %v507 = vadd.f32 %v503, %v506
    %s508 = sld [smem:[#allocation7 + $0x75]]
    %v509 = vstv %s508
    %v510 = vadd.f32 %v507, %v509
    %v511 = vmax.f32 %v510, 0.0
    %s512 = sld [smem:[#allocation7 + $0x5d]]
    %v513 = vstv %s512
    %v514 = vmul.f32 %v513, %v461
    %s515 = sld [smem:[#allocation7 + $0x5e]]
    %v516 = vstv %s515
    %v517 = vmul.f32 %v516, %v466
    %v518 = vadd.f32 %v514, %v517
    %s519 = sld [smem:[#allocation7 + $0x5f]]
    %v520 = vstv %s519
    %v521 = vmul.f32 %v520, %v471
    %v522 = vadd.f32 %v518, %v521
    %s523 = sld [smem:[#allocation7 + $0x60]]
    %v524 = vstv %s523
    %v525 = vmul.f32 %v524, %v476
    %v526 = vadd.f32 %v522, %v525
    %s527 = sld [smem:[#allocation7 + $0x61]]
    %v528 = vstv %s527
    %v529 = vmul.f32 %v528, %v423
    %v530 = vadd.f32 %v526, %v529
    %s531 = sld [smem:[#allocation7 + $0x62]]
    %v532 = vstv %s531
    %v533 = vmul.f32 %v532, %v434
    %v534 = vadd.f32 %v530, %v533
    %s535 = sld [smem:[#allocation7 + $0x63]]
    %v536 = vstv %s535
    %v537 = vmul.f32 %v536, %v445
    %v538 = vadd.f32 %v534, %v537
    %s539 = sld [smem:[#allocation7 + $0x64]]
    %v540 = vstv %s539
    %v541 = vmul.f32 %v540, %v456
    %v542 = vadd.f32 %v538, %v541
    %s543 = sld [smem:[#allocation7 + $0x76]]
    %v544 = vstv %s543
    %v545 = vadd.f32 %v542, %v544
    %v546 = vmax.f32 %v545, 0.0
    %s547 = sld [smem:[#allocation7 + $0x65]]
    %v548 = vstv %s547
    %v549 = vmul.f32 %v548, %v461
    %s550 = sld [smem:[#allocation7 + $0x66]]
    %v551 = vstv %s550
    %v552 = vmul.f32 %v551, %v466
    %v553 = vadd.f32 %v549, %v552
    %s554 = sld [smem:[#allocation7 + $0x67]]
    %v555 = vstv %s554
    %v556 = vmul.f32 %v555, %v471
    %v557 = vadd.f32 %v553, %v556
    %s558 = sld [smem:[#allocation7 + $0x68]]
    %v559 = vstv %s558
    %v560 = vmul.f32 %v559, %v476
    %v561 = vadd.f32 %v557, %v560
    %s562 = sld [smem:[#allocation7 + $0x69]]
    %v563 = vstv %s562
    %v564 = vmul.f32 %v563, %v423
    %v565 = vadd.f32 %v561, %v564
    %s566 = sld [smem:[#allocation7 + $0x6a]]
    %v567 = vstv %s566
    %v568 = vmul.f32 %v567, %v434
    %v569 = vadd.f32 %v565, %v568
    %s570 = sld [smem:[#allocation7 + $0x6b]]
    %v571 = vstv %s570
    %v572 = vmul.f32 %v571, %v445
    %v573 = vadd.f32 %v569, %v572
    %s574 = sld [smem:[#allocation7 + $0x6c]]
    %v575 = vstv %s574
    %v576 = vmul.f32 %v575, %v456
    %v577 = vadd.f32 %v573, %v576
    %s578 = sld [smem:[#allocation7 + $0x77]]
    %v579 = vstv %s578
    %v580 = vadd.f32 %v577, %v579
    %v581 = vmax.f32 %v580, 0.0
    %s582 = sld [smem:[#allocation7 + $0x6d]]
    %v583 = vstv %s582
    %v584 = vmul.f32 %v583, %v461
    %s585 = sld [smem:[#allocation7 + $0x6e]]
    %v586 = vstv %s585
    %v587 = vmul.f32 %v586, %v466
    %v588 = vadd.f32 %v584, %v587
    %s589 = sld [smem:[#allocation7 + $0x6f]]
    %v590 = vstv %s589
    %v591 = vmul.f32 %v590, %v471
    %v592 = vadd.f32 %v588, %v591
    %s593 = sld [smem:[#allocation7 + $0x70]]
    %v594 = vstv %s593
    %v595 = vmul.f32 %v594, %v476
    %v596 = vadd.f32 %v592, %v595
    %s597 = sld [smem:[#allocation7 + $0x71]]
    %v598 = vstv %s597
    %v599 = vmul.f32 %v598, %v423
    %v600 = vadd.f32 %v596, %v599
    %s601 = sld [smem:[#allocation7 + $0x72]]
    %v602 = vstv %s601
    %v603 = vmul.f32 %v602, %v434
    %v604 = vadd.f32 %v600, %v603
    %s605 = sld [smem:[#allocation7 + $0x73]]
    %v606 = vstv %s605
    %v607 = vmul.f32 %v606, %v445
    %v608 = vadd.f32 %v604, %v607
    %s609 = sld [smem:[#allocation7 + $0x74]]
    %v610 = vstv %s609
    %v611 = vmul.f32 %v610, %v456
    %v612 = vadd.f32 %v608, %v611
    %s613 = sld [smem:[#allocation7 + $0x78]]
    %v614 = vstv %s613
    %v615 = vadd.f32 %v612, %v614
    %v616 = vmax.f32 %v615, 0.0
    %s617 = sld [smem:[#allocation7 + $0x79]]
    %v618 = vstv %s617
    %v619 = vmul.f32 %v618, %v407
    %s620 = sld [smem:[#allocation7 + $0x7d]]
    %v621 = vstv %s620
    %v622 = vadd.f32 %v619, %v621
    %s623 = sld [smem:[#allocation7 + $0x7a]]
    %v624 = vstv %s623
    %v625 = vmul.f32 %v624, %v407
    %s626 = sld [smem:[#allocation7 + $0x7e]]
    %v627 = vstv %s626
    %v628 = vadd.f32 %v625, %v627
    %s629 = sld [smem:[#allocation7 + $0x7b]]
    %v630 = vstv %s629
    %v631 = vmul.f32 %v630, %v407
    %s632 = sld [smem:[#allocation7 + $0x7f]]
    %v633 = vstv %s632
    %v634 = vadd.f32 %v631, %v633
    %s635 = sld [smem:[#allocation7 + $0x7c]]
    %v636 = vstv %s635
    %v637 = vmul.f32 %v636, %v407
    %s638 = sld [smem:[#allocation7 + $0x80]]
    %v639 = vstv %s638
    %v640 = vadd.f32 %v637, %v639
    %v641 = vadd.f32 %v511, %v622
    %v642 = vmax.f32 %v641, 0.0
    %v643 = vadd.f32 %v546, %v628
    %v644 = vmax.f32 %v643, 0.0
    %v645 = vadd.f32 %v581, %v634
    %v646 = vmax.f32 %v645, 0.0
    %v647 = vadd.f32 %v616, %v640
    %v648 = vmax.f32 %v647, 0.0
    %650 = vset.pattern.permute.xlu0 0
    %651 = vperm.xlu0 %650, %v642
    %v652 = vpop.permute.xlu0 %651
    %654 = vrot.lane.b32.xlu0 %v642, 2
    %v655 = vpop.permute.xlu0 %654
    %v657 = vsel %vm303, %v652, %v655
    %659 = vset.pattern.permute.xlu0 0
    %660 = vperm.xlu0 %659, %v644
    %v661 = vpop.permute.xlu0 %660
    %663 = vrot.lane.b32.xlu0 %v644, 2
    %v664 = vpop.permute.xlu0 %663
    %v666 = vsel %vm303, %v661, %v664
    %668 = vset.pattern.permute.xlu0 0
    %669 = vperm.xlu0 %668, %v646
    %v670 = vpop.permute.xlu0 %669
    %672 = vrot.lane.b32.xlu0 %v646, 2
    %v673 = vpop.permute.xlu0 %672
    %v675 = vsel %vm303, %v670, %v673
    %677 = vset.pattern.permute.xlu0 0
    %678 = vperm.xlu0 %677, %v648
    %v679 = vpop.permute.xlu0 %678
    %681 = vrot.lane.b32.xlu0 %v648, 2
    %v682 = vpop.permute.xlu0 %681
    %v684 = vsel %vm303, %v679, %v682
    %s685 = sld [smem:[#allocation7 + $0x81]]
    %v686 = vstv %s685
    %v687 = vmul.f32 %v686, %v657
    %s688 = sld [smem:[#allocation7 + $0x82]]
    %v689 = vstv %s688
    %v690 = vmul.f32 %v689, %v666
    %v691 = vadd.f32 %v687, %v690
    %s692 = sld [smem:[#allocation7 + $0x83]]
    %v693 = vstv %s692
    %v694 = vmul.f32 %v693, %v675
    %v695 = vadd.f32 %v691, %v694
    %s696 = sld [smem:[#allocation7 + $0x84]]
    %v697 = vstv %s696
    %v698 = vmul.f32 %v697, %v684
    %v699 = vadd.f32 %v695, %v698
    %s700 = sld [smem:[#allocation7 + $0x85]]
    %v701 = vstv %s700
    %v702 = vmul.f32 %v701, %v642
    %v703 = vadd.f32 %v699, %v702
    %s704 = sld [smem:[#allocation7 + $0x86]]
    %v705 = vstv %s704
    %v706 = vmul.f32 %v705, %v644
    %v707 = vadd.f32 %v703, %v706
    %s708 = sld [smem:[#allocation7 + $0x87]]
    %v709 = vstv %s708
    %v710 = vmul.f32 %v709, %v646
    %v711 = vadd.f32 %v707, %v710
    %s712 = sld [smem:[#allocation7 + $0x88]]
    %v713 = vstv %s712
    %v714 = vmul.f32 %v713, %v648
    %v715 = vadd.f32 %v711, %v714
    %s716 = sld [smem:[#allocation7 + $0x89]]
    %v717 = vstv %s716
    %v718 = vadd.f32 %v715, %v717
    %v719 = vmax.f32 %v718, 0.0
    %721 = vset.pattern.permute.xlu0 0
    %722 = vperm.xlu0 %721, %v719
    %v723 = vpop.permute.xlu0 %722
    %725 = vrot.lane.b32.xlu0 %v719, 2
    %v726 = vpop.permute.xlu0 %725
    %v728 = vsel %vm303, %v723, %v726
    %s729 = sld [smem:[#allocation7 + $0x8a]]
    %v730 = vstv %s729
    %v731 = vmul.f32 %v730, %v728
    %s732 = sld [smem:[#allocation7 + $0x8b]]
    %v733 = vstv %s732
    %v734 = vmul.f32 %v733, %v719
    %v735 = vadd.f32 %v731, %v734
    %s736 = sld [smem:[#allocation7 + $0x8c]]
    %v737 = vstv %s736
    %v738 = vadd.f32 %v735, %v737
    %v739 = vmax.f32 %v738, 0.0
    %s740 = sld [smem:[#allocation7 + $0x8d]]
    %v741 = vstv %s740
    %v742 = vmul.f32 %v741, %v642
    %s743 = sld [smem:[#allocation7 + $0x8e]]
    %v744 = vstv %s743
    %v745 = vmul.f32 %v744, %v644
    %v746 = vadd.f32 %v742, %v745
    %s747 = sld [smem:[#allocation7 + $0x8f]]
    %v748 = vstv %s747
    %v749 = vmul.f32 %v748, %v646
    %v750 = vadd.f32 %v746, %v749
    %s751 = sld [smem:[#allocation7 + $0x90]]
    %v752 = vstv %s751
    %v753 = vmul.f32 %v752, %v648
    %v754 = vadd.f32 %v750, %v753
    %s755 = sld [smem:[#allocation7 + $0x91]]
    %v756 = vstv %s755
    %v757 = vadd.f32 %v754, %v756
    %v758 = vadd.f32 %v739, %v757
    %v759 = vmax.f32 %v758, 0.0
    %v760 = vadd.f32 %v759, %v407
    %v761 = vld [vmem:[#allocation8] ss:$8 sm:$0x7]
    %v762 = vld [vmem:[#allocation8 + $0x1] ss:$0 sm:$0xff]
    %v763 = vld [vmem:[#allocation8 + $0x2] ss:$0 sm:$0xff]
    %v764 = vld [vmem:[#allocation8 + $0x18] sm:$0x3]
    %v765 = vld [vmem:[#allocation8 + $0x30] sm:$0xff]
    %v766 = vld [vmem:[#allocation8 + $0x38] sm:$0xff]
    %v767 = vld [vmem:[#allocation8 + $0x40] sm:$0xff]
    %v768 = vld [vmem:[#allocation8 + $0x48] sm:$0x1]
    %v769 = vld [vmem:[#allocation8 + $0x50] sm:$0x1]
    %v770 = vld [vmem:[#allocation8 + $0x58] sm:$0x1]
    %v771 = vld [vmem:[#allocation8 + $0x60] sm:$0xff]
    %v772 = vld [vmem:[#allocation8 + $0x68] sm:$0xff]
    %v773 = vld [vmem:[#allocation8 + $0x70] sm:$0xff]
    %v774 = vld [vmem:[#allocation8 + $0x78] sm:$0xff]
    %v775 = vld [vmem:[#allocation8 + $0x80] sm:$0xff]
    %v776 = vld [vmem:[#allocation8 + $0x88] sm:$0xff]
    %v777 = vld [vmem:[#allocation8 + $0x90] sm:$0xff]
    %v778 = vld [vmem:[#allocation8 + $0x98] sm:$0xff]
    %v779 = vld [vmem:[#allocation8 + $0xa0] sm:$0xff]
    %v780 = vld [vmem:[#allocation8 + $0xa8] sm:$0xff]
    %v781 = vld [vmem:[#allocation8 + $0xb0] sm:$0xff]
    %v782 = vld [vmem:[#allocation8 + $0xb8] sm:$0xff]
    %v783 = vld [vmem:[#allocation8 + $0xc0] sm:$0xff]
    %v784 = vld [vmem:[#allocation8 + $0xc8] sm:$0xff]
    %v785 = vld [vmem:[#allocation8 + $0xd0] sm:$0xff]
    %v786 = vld [vmem:[#allocation8 + $0xd8] sm:$0xff]
    %v787 = vld [vmem:[#allocation8 + $0xe0] sm:$0xff]
    %v788 = vld [vmem:[#allocation8 + $0xe8] sm:$0xff]
    %v789 = vld [vmem:[#allocation8 + $0xf0] sm:$0xff]
    %v790 = vld [vmem:[#allocation8 + $0xf8] sm:$0xff]
    %v791 = vld [vmem:[#allocation8 + $0x100] sm:$0xff]
    %v792 = vld [vmem:[#allocation8 + $0x108] sm:$0xff]
    %v793 = vld [vmem:[#allocation8 + $0x110] sm:$0xff]
    %v794 = vld [vmem:[#allocation8 + $0x118] sm:$0xff]
    %v795 = vld [vmem:[#allocation8 + $0x120] sm:$0xff]
    %v796 = vld [vmem:[#allocation8 + $0x128] sm:$0xff]
    %v797 = vld [vmem:[#allocation8 + $0x130] sm:$0xff]
    %v798 = vld [vmem:[#allocation8 + $0x138] sm:$0xff]
    %v799 = vld [vmem:[#allocation8 + $0x140] sm:$0xff]
    %v800 = vld [vmem:[#allocation8 + $0x148] sm:$0xff]
    %v801 = vld [vmem:[#allocation8 + $0x150] sm:$0xff]
    %v802 = vld [vmem:[#allocation8 + $0x158] sm:$0xff]
    %v803 = vld [vmem:[#allocation8 + $0x160] sm:$0xff]
    %v804 = vld [vmem:[#allocation8 + $0x168] sm:$0xff]
    %v805 = vld [vmem:[#allocation8 + $0x170] sm:$0xff]
    %v806 = vld [vmem:[#allocation8 + $0x178] sm:$0xff]
    %v807 = vld [vmem:[#allocation8 + $0x180] sm:$0xff]
    %v808 = vld [vmem:[#allocation8 + $0x188] sm:$0xff]
    %v809 = vld [vmem:[#allocation8 + $0x190] sm:$0xff]
    %v810 = vld [vmem:[#allocation8 + $0x198] sm:$0xff]
    %v811 = vld [vmem:[#allocation8 + $0x1a0] sm:$0xff]
    %v812 = vld [vmem:[#allocation8 + $0x1a8] sm:$0xff]
    %v813 = vld [vmem:[#allocation8 + $0x1b0] sm:$0xff]
    %v814 = vld [vmem:[#allocation8 + $0x1b8] sm:$0xff]
    %v815 = vld [vmem:[#allocation8 + $0x1c0] sm:$0xff]
    %v816 = vld [vmem:[#allocation8 + $0x1c8] sm:$0xff]
    %v817 = vld [vmem:[#allocation8 + $0x1d0] sm:$0xff]
    %v818 = vld [vmem:[#allocation8 + $0x1d8] sm:$0xff]
    %v819 = vld [vmem:[#allocation8 + $0x1e0] sm:$0xff]
    %v820 = vld [vmem:[#allocation8 + $0x1f8] sm:$0xff]
    %v821 = vld [vmem:[#allocation8 + $0x210] sm:$0xff]
    %v822 = vld [vmem:[#allocation8 + $0x228] sm:$0xff]
    %v823 = vld [vmem:[#allocation8 + $0x240] sm:$0xff]
    %v824 = vld [vmem:[#allocation8 + $0x258] sm:$0xff]
    %v825 = vld [vmem:[#allocation8 + $0x270] sm:$0xff]
    %v826 = vld [vmem:[#allocation8 + $0x288] sm:$0xff]
    %v827 = vld [vmem:[#allocation8 + $0x2a0] sm:$0xff]
    %v828 = vld [vmem:[#allocation8 + $0x2b8] sm:$0xff]
    %v829 = vld [vmem:[#allocation8 + $0x2d0] sm:$0xff]
    %v830 = vld [vmem:[#allocation8 + $0x2e8] sm:$0xff]
    %v831 = vld [vmem:[#allocation8 + $0x300] sm:$0xff]
    %v832 = vld [vmem:[#allocation8 + $0x318] sm:$0xff]
    %v833 = vld [vmem:[#allocation8 + $0x330] sm:$0xff]
    %v834 = vld [vmem:[#allocation8 + $0x348] sm:$0xff]
    %835 = vst [vmem:[#allocation2] sm:$0xff] 0.0
    %v837 = vlaneseq
    %v838 = vshrl.u32 %v837, 7
    %v839 = vsub.s32 0, %v838
    %v840 = vrot.slane %v761, %v839
    %v841 = vlaneseq
    %v842 = vshrl.u32 %v841, 7
    %v843 = vsub.s32 1, %v842
    %v844 = vrot.slane %v761, %v843
    %v845 = vlaneseq
    %v846 = vshrl.u32 %v845, 7
    %v847 = vsub.s32 2, %v846
    %v848 = vrot.slane %v761, %v847
    %vm852 = vcmask 72704
    %v854 = vsel %vm852, %v760, 0
    %vm856 = vcmask 1040384
    %v858 = vsel %vm856, %v768, 0
    %v861 = vsel %vm856, %v769, 0
    %v864 = vsel %vm856, %v770, 0
    %866 = vmatprep.subr.mxu0 0.0
    %867 = vmatpush1.msra.mxu0 0.0
    %868 = vmatprep.subr.mxu0 0.0
    %869 = vmatpush1.msra.mxu0 0.0
    %870 = vmatprep.subr.mxu0 0.0
    %871 = vmatpush1.msra.mxu0 0.0
    %872 = vmatprep.subr.mxu0 0.0
    %873 = vmatpush1.msra.mxu0 0.0
    %874 = vmatprep.subr.mxu0 0.0
    %875 = vmatpush1.msra.mxu0 0.0
    %876 = vmatprep.subr.mxu0 0.0
    %877 = vmatpush1.msra.mxu0 0.0
    %878 = vmatprep.subr.mxu0 0.0
    %879 = vmatpush1.msra.mxu0 0.0
    %880 = vmatprep.subr.mxu0 0.0
    %881 = vmatpush1.msra.mxu0 0.0
    %882 = vmatprep.subr.mxu0 0.0
    %883 = vmatpush1.msra.mxu0 0.0
    %884 = vmatprep.subr.mxu0 0.0
    %885 = vmatpush1.msra.mxu0 0.0
    %886 = vmatprep.subr.mxu0 0.0
    %887 = vmatpush1.msra.mxu0 0.0
    %888 = vmatprep.subr.mxu0 0.0
    %889 = vmatpush1.msra.mxu0 0.0
    %890 = vmatprep.subr.mxu0 0.0
    %891 = vmatpush1.msra.mxu0 0.0
    %892 = vmatprep.subr.mxu0 0.0
    %893 = vmatpush1.msra.mxu0 0.0
    %894 = vmatprep.subr.mxu0 %v861
    %895 = vmatpush1.msra.mxu0 %v858
    %896 = vmatprep.subr.mxu0 %v766
    %897 = vmatpush1.msra.mxu0 %v765
    %898 = vmatprep.subr.mxu0 0.0
    %899 = vmatpush2.msra.mxu0 0.0
    %900 = vmatprep.subr.mxu0 0.0
    %901 = vmatpush2.msra.mxu0 0.0
    %902 = vmatprep.subr.mxu0 0.0
    %903 = vmatpush2.msra.mxu0 0.0
    %904 = vmatprep.subr.mxu0 0.0
    %905 = vmatpush2.msra.mxu0 0.0
    %906 = vmatprep.subr.mxu0 0.0
    %907 = vmatpush2.msra.mxu0 0.0
    %908 = vmatprep.subr.mxu0 0.0
    %909 = vmatpush2.msra.mxu0 0.0
    %910 = vmatprep.subr.mxu0 0.0
    %911 = vmatpush2.msra.mxu0 0.0
    %912 = vmatprep.subr.mxu0 0.0
    %913 = vmatpush2.msra.mxu0 0.0
    %914 = vmatprep.subr.mxu0 0.0
    %915 = vmatpush2.msra.mxu0 0.0
    %916 = vmatprep.subr.mxu0 0.0
    %917 = vmatpush2.msra.mxu0 0.0
    %918 = vmatprep.subr.mxu0 0.0
    %919 = vmatpush2.msra.mxu0 0.0
    %920 = vmatprep.subr.mxu0 0.0
    %921 = vmatpush2.msra.mxu0 0.0
    %922 = vmatprep.subr.mxu0 0.0
    %923 = vmatpush2.msra.mxu0 0.0
    %924 = vmatprep.subr.mxu0 0.0
    %925 = vmatpush2.msra.mxu0 0.0
    %926 = vmatprep.subr.mxu0 0.0
    %927 = vmatpush2.msra.mxu0 0.0
    %928 = vmatprep.subr.mxu0 0.0
    %929 = vmatpush2.msra.mxu0 0.0
    %930 = vmatprep.mubr.f32.mxu0 0.0
    %931 = vmatmul.mubr.f32.gmra.mxu0 %v854
    %v932 = vpop.f32.mrf.mxu0
    %v933 = vadd.f32 %v840, %v932
    %v934 = vpop.f32.mrf.mxu0
    %v935 = vadd.f32 %v844, %v934
    %936 = vdwg.mxu0
    %937 = vmatprep.subr.mxu0 0.0
    %938 = vmatpush1.msra.mxu0 0.0
    %939 = vmatprep.subr.mxu0 0.0
    %940 = vmatpush1.msra.mxu0 0.0
    %941 = vmatprep.subr.mxu0 0.0
    %942 = vmatpush1.msra.mxu0 0.0
    %943 = vmatprep.subr.mxu0 0.0
    %944 = vmatpush1.msra.mxu0 0.0
    %945 = vmatprep.subr.mxu0 0.0
    %946 = vmatpush1.msra.mxu0 0.0
    %947 = vmatprep.subr.mxu0 0.0
    %948 = vmatpush1.msra.mxu0 0.0
    %949 = vmatprep.subr.mxu0 0.0
    %950 = vmatpush1.msra.mxu0 0.0
    %951 = vmatprep.subr.mxu0 0.0
    %952 = vmatpush1.msra.mxu0 0.0
    %953 = vmatprep.subr.mxu0 0.0
    %954 = vmatpush1.msra.mxu0 0.0
    %955 = vmatprep.subr.mxu0 0.0
    %956 = vmatpush1.msra.mxu0 0.0
    %957 = vmatprep.subr.mxu0 0.0
    %958 = vmatpush1.msra.mxu0 0.0
    %959 = vmatprep.subr.mxu0 0.0
    %960 = vmatpush1.msra.mxu0 0.0
    %961 = vmatprep.subr.mxu0 0.0
    %962 = vmatpush1.msra.mxu0 0.0
    %963 = vmatprep.subr.mxu0 0.0
    %964 = vmatpush1.msra.mxu0 0.0
    %965 = vmatprep.subr.mxu0 0.0
    %966 = vmatpush1.msra.mxu0 %v864
    %967 = vmatprep.subr.mxu0 0.0
    %968 = vmatpush1.msra.mxu0 %v767
    %969 = vmatprep.subr.mxu0 0.0
    %970 = vmatpush2.msra.mxu0 0.0
    %971 = vmatprep.subr.mxu0 0.0
    %972 = vmatpush2.msra.mxu0 0.0
    %973 = vmatprep.subr.mxu0 0.0
    %974 = vmatpush2.msra.mxu0 0.0
    %975 = vmatprep.subr.mxu0 0.0
    %976 = vmatpush2.msra.mxu0 0.0
    %977 = vmatprep.subr.mxu0 0.0
    %978 = vmatpush2.msra.mxu0 0.0
    %979 = vmatprep.subr.mxu0 0.0
    %980 = vmatpush2.msra.mxu0 0.0
    %981 = vmatprep.subr.mxu0 0.0
    %982 = vmatpush2.msra.mxu0 0.0
    %983 = vmatprep.subr.mxu0 0.0
    %984 = vmatpush2.msra.mxu0 0.0
    %985 = vmatprep.subr.mxu0 0.0
    %986 = vmatpush2.msra.mxu0 0.0
    %987 = vmatprep.subr.mxu0 0.0
    %988 = vmatpush2.msra.mxu0 0.0
    %989 = vmatprep.subr.mxu0 0.0
    %990 = vmatpush2.msra.mxu0 0.0
    %991 = vmatprep.subr.mxu0 0.0
    %992 = vmatpush2.msra.mxu0 0.0
    %993 = vmatprep.subr.mxu0 0.0
    %994 = vmatpush2.msra.mxu0 0.0
    %995 = vmatprep.subr.mxu0 0.0
    %996 = vmatpush2.msra.mxu0 0.0
    %997 = vmatprep.subr.mxu0 0.0
    %998 = vmatpush2.msra.mxu0 0.0
    %999 = vmatprep.subr.mxu0 0.0
    %1000 = vmatpush2.msra.mxu0 0.0
    %1001 = vmatprep.mubr.f32.mxu0 0.0
    %1002 = vmatmul.mubr.f32.gmra.mxu0 %v854
    %v1003 = vpop.f32.mrf.mxu0
    %v1004 = vadd.f32 %v848, %v1003
    %v1005 = vpop.f32.mrf.mxu0
    %1006 = vdwg.mxu0
    %1007 = vmatprep.subr.mxu0 %v817
    %1008 = vmatpush1.msra.mxu0 %v816
    %1009 = vmatprep.subr.mxu0 %v814
    %1010 = vmatpush1.msra.mxu0 %v813
    %1011 = vmatprep.subr.mxu0 %v811
    %1012 = vmatpush1.msra.mxu0 %v810
    %1013 = vmatprep.subr.mxu0 %v808
    %1014 = vmatpush1.msra.mxu0 %v807
    %1015 = vmatprep.subr.mxu0 %v805
    %1016 = vmatpush1.msra.mxu0 %v804
    %1017 = vmatprep.subr.mxu0 %v802
    %1018 = vmatpush1.msra.mxu0 %v801
    %1019 = vmatprep.subr.mxu0 %v799
    %1020 = vmatpush1.msra.mxu0 %v798
    %1021 = vmatprep.subr.mxu0 %v796
    %1022 = vmatpush1.msra.mxu0 %v795
    %1023 = vmatprep.subr.mxu0 %v793
    %1024 = vmatpush1.msra.mxu0 %v792
    %1025 = vmatprep.subr.mxu0 %v790
    %1026 = vmatpush1.msra.mxu0 %v789
    %1027 = vmatprep.subr.mxu0 %v787
    %1028 = vmatpush1.msra.mxu0 %v786
    %1029 = vmatprep.subr.mxu0 %v784
    %1030 = vmatpush1.msra.mxu0 %v783
    %1031 = vmatprep.subr.mxu0 %v781
    %1032 = vmatpush1.msra.mxu0 %v780
    %1033 = vmatprep.subr.mxu0 %v778
    %1034 = vmatpush1.msra.mxu0 %v777
    %1035 = vmatprep.subr.mxu0 %v775
    %1036 = vmatpush1.msra.mxu0 %v774
    %1037 = vmatprep.subr.mxu0 %v772
    %1038 = vmatpush1.msra.mxu0 %v771
    %1039 = vmatprep.subr.mxu0 0.0
    %1040 = vmatpush2.msra.mxu0 0.0
    %1041 = vmatprep.subr.mxu0 0.0
    %1042 = vmatpush2.msra.mxu0 0.0
    %1043 = vmatprep.subr.mxu0 0.0
    %1044 = vmatpush2.msra.mxu0 0.0
    %1045 = vmatprep.subr.mxu0 0.0
    %1046 = vmatpush2.msra.mxu0 0.0
    %1047 = vmatprep.subr.mxu0 0.0
    %1048 = vmatpush2.msra.mxu0 0.0
    %1049 = vmatprep.subr.mxu0 0.0
    %1050 = vmatpush2.msra.mxu0 0.0
    %1051 = vmatprep.subr.mxu0 0.0
    %1052 = vmatpush2.msra.mxu0 0.0
    %1053 = vmatprep.subr.mxu0 0.0
    %1054 = vmatpush2.msra.mxu0 0.0
    %1055 = vmatprep.subr.mxu0 0.0
    %1056 = vmatpush2.msra.mxu0 0.0
    %1057 = vmatprep.subr.mxu0 0.0
    %1058 = vmatpush2.msra.mxu0 0.0
    %1059 = vmatprep.subr.mxu0 0.0
    %1060 = vmatpush2.msra.mxu0 0.0
    %1061 = vmatprep.subr.mxu0 0.0
    %1062 = vmatpush2.msra.mxu0 0.0
    %1063 = vmatprep.subr.mxu0 0.0
    %1064 = vmatpush2.msra.mxu0 0.0
    %1065 = vmatprep.subr.mxu0 0.0
    %1066 = vmatpush2.msra.mxu0 0.0
    %1067 = vmatprep.subr.mxu0 0.0
    %1068 = vmatpush2.msra.mxu0 0.0
    %1069 = vmatprep.subr.mxu0 0.0
    %1070 = vmatpush2.msra.mxu0 0.0
    %1071 = vmatprep.mubr.f32.mxu0 0.0
    %1072 = vmatmul.mubr.f32.gmra.mxu0 %v764
    %v1073 = vpop.f32.mrf.mxu0
    %v1074 = vadd.f32 0.0, %v1073
    %v1075 = vpop.f32.mrf.mxu0
    %v1076 = vadd.f32 0.0, %v1075
    %1077 = vdwg.mxu0
    %1078 = vmatprep.subr.mxu0 0.0
    %1079 = vmatpush1.msra.mxu0 %v818
    %1080 = vmatprep.subr.mxu0 0.0
    %1081 = vmatpush1.msra.mxu0 %v815
    %1082 = vmatprep.subr.mxu0 0.0
    %1083 = vmatpush1.msra.mxu0 %v812
    %1084 = vmatprep.subr.mxu0 0.0
    %1085 = vmatpush1.msra.mxu0 %v809
    %1086 = vmatprep.subr.mxu0 0.0
    %1087 = vmatpush1.msra.mxu0 %v806
    %1088 = vmatprep.subr.mxu0 0.0
    %1089 = vmatpush1.msra.mxu0 %v803
    %1090 = vmatprep.subr.mxu0 0.0
    %1091 = vmatpush1.msra.mxu0 %v800
    %1092 = vmatprep.subr.mxu0 0.0
    %1093 = vmatpush1.msra.mxu0 %v797
    %1094 = vmatprep.subr.mxu0 0.0
    %1095 = vmatpush1.msra.mxu0 %v794
    %1096 = vmatprep.subr.mxu0 0.0
    %1097 = vmatpush1.msra.mxu0 %v791
    %1098 = vmatprep.subr.mxu0 0.0
    %1099 = vmatpush1.msra.mxu0 %v788
    %1100 = vmatprep.subr.mxu0 0.0
    %1101 = vmatpush1.msra.mxu0 %v785
    %1102 = vmatprep.subr.mxu0 0.0
    %1103 = vmatpush1.msra.mxu0 %v782
    %1104 = vmatprep.subr.mxu0 0.0
    %1105 = vmatpush1.msra.mxu0 %v779
    %1106 = vmatprep.subr.mxu0 0.0
    %1107 = vmatpush1.msra.mxu0 %v776
    %1108 = vmatprep.subr.mxu0 0.0
    %1109 = vmatpush1.msra.mxu0 %v773
    %1110 = vmatprep.subr.mxu0 0.0
    %1111 = vmatpush2.msra.mxu0 0.0
    %1112 = vmatprep.subr.mxu0 0.0
    %1113 = vmatpush2.msra.mxu0 0.0
    %1114 = vmatprep.subr.mxu0 0.0
    %1115 = vmatpush2.msra.mxu0 0.0
    %1116 = vmatprep.subr.mxu0 0.0
    %1117 = vmatpush2.msra.mxu0 0.0
    %1118 = vmatprep.subr.mxu0 0.0
    %1119 = vmatpush2.msra.mxu0 0.0
    %1120 = vmatprep.subr.mxu0 0.0
    %1121 = vmatpush2.msra.mxu0 0.0
    %1122 = vmatprep.subr.mxu0 0.0
    %1123 = vmatpush2.msra.mxu0 0.0
    %1124 = vmatprep.subr.mxu0 0.0
    %1125 = vmatpush2.msra.mxu0 0.0
    %1126 = vmatprep.subr.mxu0 0.0
    %1127 = vmatpush2.msra.mxu0 0.0
    %1128 = vmatprep.subr.mxu0 0.0
    %1129 = vmatpush2.msra.mxu0 0.0
    %1130 = vmatprep.subr.mxu0 0.0
    %1131 = vmatpush2.msra.mxu0 0.0
    %1132 = vmatprep.subr.mxu0 0.0
    %1133 = vmatpush2.msra.mxu0 0.0
    %1134 = vmatprep.subr.mxu0 0.0
    %1135 = vmatpush2.msra.mxu0 0.0
    %1136 = vmatprep.subr.mxu0 0.0
    %1137 = vmatpush2.msra.mxu0 0.0
    %1138 = vmatprep.subr.mxu0 0.0
    %1139 = vmatpush2.msra.mxu0 0.0
    %1140 = vmatprep.subr.mxu0 0.0
    %1141 = vmatpush2.msra.mxu0 0.0
    %1142 = vmatprep.mubr.f32.mxu0 0.0
    %1143 = vmatmul.mubr.f32.gmra.mxu0 %v764
    %v1144 = vpop.f32.mrf.mxu0
    %v1145 = vadd.f32 0.0, %v1144
    %v1146 = vpop.f32.mrf.mxu0
    %1147 = vdwg.mxu0
    %v1148 = vadd.f32 %v933, %v1074
    %v1149 = vxor.u32 %v1148, 2147483648
    %v1150 = vmul.f32 %v1149, 1.442695
    %v1151 = vpow.pop %v1150
    %v1152 = vadd.f32 %v1151, 1.0
    %v1153 = vrcp.pop %v1152
    %v1154 = vmul.f32 1.0, %v1153
    %v1155 = vadd.f32 %v935, %v1076
    %v1156 = vxor.u32 %v1155, 2147483648
    %v1157 = vmul.f32 %v1156, 1.442695
    %v1158 = vpow.pop %v1157
    %v1159 = vadd.f32 %v1158, 1.0
    %v1160 = vrcp.pop %v1159
    %v1161 = vmul.f32 1.0, %v1160
    %v1162 = vadd.f32 %v1145, %v762
    %v1163 = vmul.f32 %v1154, %v1162
    %v1164 = vadd.f32 %v1004, %v1163
    %v1165 = vtanh.pop %v1164
    %v1166 = vsub.f32 1.0, %v1161
    %v1167 = vmul.f32 %v1166, %v1165
    %v1168 = vmul.f32 %v1161, %v764
    %v1169 = vadd.f32 %v1167, %v1168
    %1170 = vst [vmem:[#allocation2] sm:$0x3] %v1169
    %v1171 = vld [vmem:[#allocation2] sm:$0xff]
    %1172 = vmatprep.subr.mxu0 0.0
    %1173 = vmatpush1.msra.mxu0 %v834
    %1174 = vmatprep.subr.mxu0 0.0
    %1175 = vmatpush1.msra.mxu0 %v833
    %1176 = vmatprep.subr.mxu0 0.0
    %1177 = vmatpush1.msra.mxu0 %v832
    %1178 = vmatprep.subr.mxu0 0.0
    %1179 = vmatpush1.msra.mxu0 %v831
    %1180 = vmatprep.subr.mxu0 0.0
    %1181 = vmatpush1.msra.mxu0 %v830
    %1182 = vmatprep.subr.mxu0 0.0
    %1183 = vmatpush1.msra.mxu0 %v829
    %1184 = vmatprep.subr.mxu0 0.0
    %1185 = vmatpush1.msra.mxu0 %v828
    %1186 = vmatprep.subr.mxu0 0.0
    %1187 = vmatpush1.msra.mxu0 %v827
    %1188 = vmatprep.subr.mxu0 0.0
    %1189 = vmatpush1.msra.mxu0 %v826
    %1190 = vmatprep.subr.mxu0 0.0
    %1191 = vmatpush1.msra.mxu0 %v825
    %1192 = vmatprep.subr.mxu0 0.0
    %1193 = vmatpush1.msra.mxu0 %v824
    %1194 = vmatprep.subr.mxu0 0.0
    %1195 = vmatpush1.msra.mxu0 %v823
    %1196 = vmatprep.subr.mxu0 0.0
    %1197 = vmatpush1.msra.mxu0 %v822
    %1198 = vmatprep.subr.mxu0 0.0
    %1199 = vmatpush1.msra.mxu0 %v821
    %1200 = vmatprep.subr.mxu0 0.0
    %1201 = vmatpush1.msra.mxu0 %v820
    %1202 = vmatprep.subr.mxu0 0.0
    %1203 = vmatpush1.msra.mxu0 %v819
    %1204 = vmatprep.subr.mxu0 0.0
    %1205 = vmatpush2.msra.mxu0 0.0
    %1206 = vmatprep.subr.mxu0 0.0
    %1207 = vmatpush2.msra.mxu0 0.0
    %1208 = vmatprep.subr.mxu0 0.0
    %1209 = vmatpush2.msra.mxu0 0.0
    %1210 = vmatprep.subr.mxu0 0.0
    %1211 = vmatpush2.msra.mxu0 0.0
    %1212 = vmatprep.subr.mxu0 0.0
    %1213 = vmatpush2.msra.mxu0 0.0
    %1214 = vmatprep.subr.mxu0 0.0
    %1215 = vmatpush2.msra.mxu0 0.0
    %1216 = vmatprep.subr.mxu0 0.0
    %1217 = vmatpush2.msra.mxu0 0.0
    %1218 = vmatprep.subr.mxu0 0.0
    %1219 = vmatpush2.msra.mxu0 0.0
    %1220 = vmatprep.subr.mxu0 0.0
    %1221 = vmatpush2.msra.mxu0 0.0
    %1222 = vmatprep.subr.mxu0 0.0
    %1223 = vmatpush2.msra.mxu0 0.0
    %1224 = vmatprep.subr.mxu0 0.0
    %1225 = vmatpush2.msra.mxu0 0.0
    %1226 = vmatprep.subr.mxu0 0.0
    %1227 = vmatpush2.msra.mxu0 0.0
    %1228 = vmatprep.subr.mxu0 0.0
    %1229 = vmatpush2.msra.mxu0 0.0
    %1230 = vmatprep.subr.mxu0 0.0
    %1231 = vmatpush2.msra.mxu0 0.0
    %1232 = vmatprep.subr.mxu0 0.0
    %1233 = vmatpush2.msra.mxu0 0.0
    %1234 = vmatprep.subr.mxu0 0.0
    %1235 = vmatpush2.msra.mxu0 0.0
    %1236 = vmatprep.mubr.f32.mxu0 0.0
    %1237 = vmatmul.mubr.f32.gmra.mxu0 %v1171
    %v1238 = vpop.f32.mrf.mxu0
    %v1239 = vadd.f32 %v763, %v1238
    %v1240 = vpop.f32.mrf.mxu0
    %1241 = vdwg.mxu0
    %1242 = vst [vmem:[#allocation10] sm:$0xff] %v1239
    // Predicated region
    $region26: #{tpu_custom_call.1} parent=1 // pred_check
      _
    $region27: #{tpu_custom_call.1} parent=1 // pred_check_branch
      %1244 = sbr.rel (0) target = $region29
    $region28: #{tpu_custom_call.1} parent=1 // pred_region
      %s1246 = ssub.s32 128, 128
      %1247 = vsyncadd [#allocation5], %s1246
      %s1249 = sshll.u32 [#allocation10], 4
      %s1250 = int_to_ptr.vmem [resolvable:$true] %s1249
      %1252 = dma.vmem_to_hbm [thread:$0]  %s1250, 128, %s3, [#allocation5]
    $region29: #{tpu_custom_call.1} parent=1 // pred_fallthru
      _
    // Predicated region
    $region30: #{tpu_custom_call.1} parent=1 // pred_check
      _
    $region31: #{tpu_custom_call.1} parent=1 // pred_check_branch
      %1254 = sbr.rel (0) target = $region33
    $region32: #{tpu_custom_call.1} parent=1 // pred_region
      %1255 = dma.done [#allocation5], 128
    $region33: #{tpu_custom_call.1} parent=1 // pred_fallthru
      _
    %1256 = vsyncpa [#allocation4], 1
    %1257 = vsyncpa [#allocation9], 1
    %1258 = vsyncpa [#allocation5], 1
    %1259 = vsyncpa [#allocation6], 1

</llo_original>
